<compile_context>
chip_gen: v7x
topology: tpu7x:2x2x1
jax: 0.10.0
libtpu: 0.0.40
codegen_flags: <defaults>
</compile_context>

<pallas_src>
import jax
import jax.numpy as jnp
from jax import lax
from jax.experimental import pallas as pl
from jax.experimental.pallas import tpu as pltpu


_SUBLANE = 8     # f32 sublane tile
_LANE = 128      # lane tile


def _round_up(x, m):
    return (x + m - 1) // m * m


def make_rnn_encoder_kernel(seq, batch_p, rnn_hidden, num_layers):
    """Build the kernel body for static (seq, padded batch, H, num_layers)."""
    S, Bp, H = seq, batch_p, rnn_hidden

    def kernel(*refs):
        # inputs : x_flat (S*Bp, inp)    [row = t*Bp + b, time-major, Bp % 8 == 0]
        #          w1 (inp, hidden), b1 (1, hidden)
        #          per layer: w_ih (in_l, 4H), w_hh (H, 4H), b (1, 4H)
        #                     fused gate order (i, f, o, g); b = b_ih + b_hh
        #          w2p (H, Zp), b2p (1, Zp)   [z_dim zero-padded to Zp=128 lanes]
        # outputs: z_flat (S*Bp, Zp)
        x_ref, w1_ref, b1_ref = refs[0], refs[1], refs[2]
        layer_refs = refs[3:3 + 3 * num_layers]
        w2_ref, b2_ref, out_ref = refs[3 + 3 * num_layers:]

        # ---- Stage 1 (hoisted): linear1 + tanh for ALL timesteps -------------
        a = jnp.tanh(
            jnp.dot(x_ref[...], w1_ref[...], preferred_element_type=jnp.float32)
            + b1_ref[...]
        )                                                   # (S*Bp, hidden)

        # Hoisted lane mask: lanes [0, 3H) -> sigmoid (i, f, o), [3H, 4H) -> tanh (g).
        lane = lax.broadcasted_iota(jnp.int32, (Bp, 4 * H), 1)
        sig_mask = lane < 3 * H

        # ---- Stage 2: stacked LSTM layers -------------------------------------
        for l in range(num_layers):
            w_ih = layer_refs[3 * l][...]                   # (in_l, 4H)
            w_hh = layer_refs[3 * l + 1][...]               # (H, 4H)
            b_g = layer_refs[3 * l + 2][...]                # (1, 4H)

            # Hoisted input projection + fused bias for ALL timesteps:
            # one (S*Bp, in_l) @ (in_l, 4H) matmul, lane-dense N = 4H.
            pre = (
                jnp.dot(a, w_ih, preferred_element_type=jnp.float32) + b_g
            )                                               # (S*Bp, 4H)

            h = jnp.zeros((Bp, H), jnp.float32)
            c = jnp.zeros((Bp, H), jnp.float32)
            hs = []

            # Serial recurrence, fully unrolled (static, small S).  Per step:
            # one small matmul + one sigmoid + two tanh + a few VPU ops.
            # Bp % 8 == 0, so each pre-slice starts on a sublane-tile boundary
            # (a clean static sub-tile view; no masked sublane extracts).
            for t in range(S):
                gates = pre[t * Bp:(t + 1) * Bp, :] + jnp.dot(
                    h, w_hh, preferred_element_type=jnp.float32
                )                                           # (Bp, 4H)
                # One sigmoid + one tanh over the whole 4H-lane vreg (EUP is
                # whole-vreg anyway), combined with the hoisted lane mask.
                act = jnp.where(sig_mask,
                                jax.nn.sigmoid(gates),
                                jnp.tanh(gates))            # (Bp, 4H)
                i_g = act[:, 0 * H:1 * H]
                f_g = act[:, 1 * H:2 * H]
                o_g = act[:, 2 * H:3 * H]
                g_g = act[:, 3 * H:4 * H]
                c = f_g * c + i_g * g_g
                h = o_g * jnp.tanh(c)
                hs.append(h)                                # stays in vregs

            a = jnp.concatenate(hs, axis=0)                 # (S*Bp, H) -> next layer

        # ---- Stage 3 (hoisted): lane-dense linear2 for ALL timesteps ----------
        out_ref[...] = (
            jnp.dot(a, w2_ref[...], preferred_element_type=jnp.float32)
            + b2_ref[...]
        ).astype(out_ref.dtype)

    return kernel


def rnn_encoder_forward(x, params):
    """x: (batch, seq, inp_dim) -> z: (batch, seq, z_dim)."""
    B, S, inp_dim = x.shape
    H, z_dim = params["w2"].shape
    hidden_dim = params["w1"].shape[1]
    num_layers = len(params["layers"])

    Bp = _round_up(B, _SUBLANE)       # pad batch -> unmasked sublanes
    Zp = _round_up(z_dim, _LANE)      # pad z_dim -> lane-dense output stores

    # Time-major, batch-padded, flattened (row = t*Bp + b).  These wrapper-side
    # reshapes/pads are layout plumbing on ~KB tensors; they keep every
    # in-kernel slice contiguous, sublane-tile-aligned and lane-dense.
    x_tm = jnp.transpose(x, (1, 0, 2))                      # (S, B, inp)
    x_tm = jnp.pad(x_tm, ((0, 0), (0, Bp - B), (0, 0)))     # (S, Bp, inp)
    x_flat = x_tm.reshape(S * Bp, inp_dim)

    # Zero-pad linear2 to a lane-dense (H, 128) projection; padded lanes are
    # exactly zero and sliced off outside the kernel.
    w2p = jnp.pad(params["w2"], ((0, 0), (0, Zp - z_dim)))
    b2p = jnp.pad(params["b2"], ((0, 0), (0, Zp - z_dim)))

    args = [x_flat, params["w1"], params["b1"]]
    for (w_ih, w_hh, b) in params["layers"]:
        args.extend([w_ih, w_hh, b])
    args.extend([w2p, b2p])

    kernel = make_rnn_encoder_kernel(S, Bp, H, num_layers)

    # Advisory cost estimate for XLA's scheduler.
    flops = 2 * S * Bp * inp_dim * hidden_dim + 2 * S * Bp * H * Zp
    transcendentals = S * Bp * hidden_dim
    for l in range(num_layers):
        in_l = hidden_dim if l == 0 else H
        flops += 2 * S * Bp * in_l * 4 * H + 2 * S * Bp * H * 4 * H
        transcendentals += S * Bp * (4 * H + H)
    bytes_accessed = sum(int(a.size) * 4 for a in args) + S * Bp * Zp * 4

    z_flat = pl.pallas_call(
        kernel,
        out_shape=jax.ShapeDtypeStruct((S * Bp, Zp), jnp.float32),
        in_specs=[pl.BlockSpec(memory_space=pltpu.MemorySpace.VMEM)
                  for _ in args],
        out_specs=pl.BlockSpec(memory_space=pltpu.MemorySpace.VMEM),
        cost_estimate=pl.CostEstimate(
            flops=int(flops),
            transcendentals=int(transcendentals),
            bytes_accessed=int(bytes_accessed)),
    )(*args)

    z = z_flat.reshape(S, Bp, Zp)[:, :B, :z_dim]            # drop padding
    return jnp.transpose(z, (1, 0, 2))                      # (B, S, z_dim)


# ---------------------------------------------------------------------------
# Deterministic parameter construction (mirrors nn.Linear / nn.LSTM shapes,
# with the 4 gate weights pre-fused into lane-dense (in, 4H) matrices and a
# single fused bias per layer; fused gate order is (i, f, o, g)).
# ---------------------------------------------------------------------------
def init_params(key, inp_dim, z_dim, hidden_dim, rnn_hidden_dim, num_layers):
    keys = jax.random.split(key, 4 + 3 * num_layers)
    k_iter = iter(keys)

    def uni(k, shape, fan_in):
        bound = 1.0 / jnp.sqrt(jnp.float32(fan_in))
        return jax.random.uniform(k, shape, jnp.float32, -bound, bound)

    params = {
        "w1": uni(next(k_iter), (inp_dim, hidden_dim), inp_dim),
        "b1": uni(next(k_iter), (1, hidden_dim), inp_dim),
        "w2": uni(next(k_iter), (rnn_hidden_dim, z_dim), rnn_hidden_dim),
        "b2": uni(next(k_iter), (1, z_dim), rnn_hidden_dim),
        "layers": [],
    }
    for l in range(num_layers):
        in_l = hidden_dim if l == 0 else rnn_hidden_dim
        w_ih = uni(next(k_iter), (in_l, 4 * rnn_hidden_dim), rnn_hidden_dim)
        w_hh = uni(next(k_iter), (rnn_hidden_dim, 4 * rnn_hidden_dim),
                   rnn_hidden_dim)
        b = uni(next(k_iter), (1, 4 * rnn_hidden_dim), rnn_hidden_dim)
        params["layers"].append((w_ih, w_hh, b))
    return params


# ---------------------------------------------------------------------------
# Pure-JAX reference (same math, fused (i, f, o, g) gate layout) for checking.
# ---------------------------------------------------------------------------
def reference_forward(x, params):
    B = x.shape[0]
    xs = jnp.transpose(x, (1, 0, 2))                      # (S, B, inp)
    a = jnp.tanh(xs @ params["w1"] + params["b1"])        # (S, B, hidden)
    H = params["w2"].shape[0]
    for (w_ih, w_hh, b) in params["layers"]:

        def step(carry, x_t, w_ih=w_ih, w_hh=w_hh, b=b):
            h, c = carry
            gates = x_t @ w_ih + h @ w_hh + b             # (B, 4H), (i,f,o,g)
            i_g = jax.nn.sigmoid(gates[:, 0 * H:1 * H])
            f_g = jax.nn.sigmoid(gates[:, 1 * H:2 * H])
            o_g = jax.nn.sigmoid(gates[:, 2 * H:3 * H])
            g_g = jnp.tanh(gates[:, 3 * H:4 * H])
            c = f_g * c + i_g * g_g
            h = o_g * jnp.tanh(c)
            return (h, c), h

        init = (jnp.zeros((B, H), jnp.float32), jnp.zeros((B, H), jnp.float32))
        _, hs = lax.scan(step, init, a)
        a = hs
    z = a @ params["w2"] + params["b2"]
    return jnp.transpose(z, (1, 0, 2))


if __name__ == "__main__":
    # Small shapes consistent with the module's forward.
    batch, seq = 2, 8
    inp_dim, hidden_dim, rnn_hidden_dim, z_dim, num_layers = 4, 32, 32, 8, 2

    key = jax.random.PRNGKey(0)
    k_x, k_p = jax.random.split(key)
    x = jax.random.normal(k_x, (batch, seq, inp_dim), jnp.float32)
    params = init_params(k_p, inp_dim, z_dim, hidden_dim, rnn_hidden_dim,
                         num_layers)

    fwd = jax.jit(rnn_encoder_forward)
    z = jax.block_until_ready(fwd(x, params))

    z_ref = jax.block_until_ready(reference_forward(x, params))
    assert z.shape == (batch, seq, z_dim), z.shape
    max_err = float(jnp.max(jnp.abs(z - z_ref)))
    assert jnp.allclose(z, z_ref, atol=1e-4, rtol=1e-4), max_err

    print("KERNEL_OK")
</pallas_src>

<mosaic_0001>
module attributes {stable_mosaic.version = 11 : i64} {
  func.func @kernel(%arg0: memref<64x4xf32, #tpu.memory_space<vmem>>, %arg1: memref<4x32xf32, #tpu.memory_space<vmem>>, %arg2: memref<1x32xf32, #tpu.memory_space<vmem>>, %arg3: memref<32x128xf32, #tpu.memory_space<vmem>>, %arg4: memref<32x128xf32, #tpu.memory_space<vmem>>, %arg5: memref<1x128xf32, #tpu.memory_space<vmem>>, %arg6: memref<32x128xf32, #tpu.memory_space<vmem>>, %arg7: memref<32x128xf32, #tpu.memory_space<vmem>>, %arg8: memref<1x128xf32, #tpu.memory_space<vmem>>, %arg9: memref<32x128xf32, #tpu.memory_space<vmem>>, %arg10: memref<1x128xf32, #tpu.memory_space<vmem>>, %arg11: memref<64x128xf32, #tpu.memory_space<vmem>>) attributes {dimension_semantics = [], scalar_prefetch = 0 : i64, scratch_operands = 0 : i64, tpu.core_type = #tpu.core_type<tc>} {
    %c0 = arith.constant 0 : index
    %c0_0 = arith.constant 0 : index
    %0 = vector.load %arg0[%c0, %c0_0] : memref<64x4xf32, #tpu.memory_space<vmem>>, vector<64x4xf32>
    %c0_1 = arith.constant 0 : index
    %c0_2 = arith.constant 0 : index
    %1 = vector.load %arg1[%c0_1, %c0_2] : memref<4x32xf32, #tpu.memory_space<vmem>>, vector<4x32xf32>
    %cst = arith.constant dense<0.000000e+00> : vector<64x32xf32>
    %2 = tpu.matmul %0, %1, %cst {dimension_numbers = #tpu.dot_dimension_numbers<[1], [0], [0], [1], [0, 0, 1, 1], [], []>} : vector<64x4xf32>, vector<4x32xf32>, vector<64x32xf32> -> vector<64x32xf32>
    %c0_3 = arith.constant 0 : index
    %c0_4 = arith.constant 0 : index
    %3 = vector.load %arg2[%c0_3, %c0_4] : memref<1x32xf32, #tpu.memory_space<vmem>>, vector<1x32xf32>
    %4 = vector.broadcast %3 : vector<1x32xf32> to vector<64x32xf32>
    %5 = arith.addf %2, %4 : vector<64x32xf32>
    %6 = math.tanh %5 : vector<64x32xf32>
    %7 = tpu.iota {dimensions = array<i32: 1>} : vector<8x128xi32>
    %c96_i32 = arith.constant 96 : i32
    %8 = vector.broadcast %c96_i32 : i32 to vector<8x128xi32>
    %9 = arith.cmpi slt, %7, %8 : vector<8x128xi32>
    %c0_5 = arith.constant 0 : index
    %c0_6 = arith.constant 0 : index
    %10 = vector.load %arg3[%c0_5, %c0_6] : memref<32x128xf32, #tpu.memory_space<vmem>>, vector<32x128xf32>
    %c0_7 = arith.constant 0 : index
    %c0_8 = arith.constant 0 : index
    %11 = vector.load %arg4[%c0_7, %c0_8] : memref<32x128xf32, #tpu.memory_space<vmem>>, vector<32x128xf32>
    %c0_9 = arith.constant 0 : index
    %c0_10 = arith.constant 0 : index
    %12 = vector.load %arg5[%c0_9, %c0_10] : memref<1x128xf32, #tpu.memory_space<vmem>>, vector<1x128xf32>
    %cst_11 = arith.constant dense<0.000000e+00> : vector<64x128xf32>
    %13 = tpu.matmul %6, %10, %cst_11 {dimension_numbers = #tpu.dot_dimension_numbers<[1], [0], [0], [1], [0, 0, 1, 1], [], []>} : vector<64x32xf32>, vector<32x128xf32>, vector<64x128xf32> -> vector<64x128xf32>
    %14 = vector.broadcast %12 : vector<1x128xf32> to vector<64x128xf32>
    %15 = arith.addf %13, %14 : vector<64x128xf32>
    %cst_12 = arith.constant 0.000000e+00 : f32
    %16 = vector.broadcast %cst_12 : f32 to vector<8x32xf32>
    %cst_13 = arith.constant 0.000000e+00 : f32
    %17 = vector.broadcast %cst_13 : f32 to vector<8x32xf32>
    %18 = vector.extract_strided_slice %15 {offsets = [0, 0], sizes = [8, 128], strides = [1, 1]} : vector<64x128xf32> to vector<8x128xf32>
    %cst_14 = arith.constant dense<0.000000e+00> : vector<8x128xf32>
    %19 = tpu.matmul %16, %11, %cst_14 {dimension_numbers = #tpu.dot_dimension_numbers<[1], [0], [0], [1], [0, 0, 1, 1], [], []>} : vector<8x32xf32>, vector<32x128xf32>, vector<8x128xf32> -> vector<8x128xf32>
    %20 = arith.addf %18, %19 : vector<8x128xf32>
    %21 = arith.negf %20 : vector<8x128xf32>
    %22 = math.exp %21 : vector<8x128xf32>
    %cst_15 = arith.constant 1.000000e+00 : f32
    %23 = vector.broadcast %cst_15 : f32 to vector<8x128xf32>
    %24 = arith.addf %23, %22 : vector<8x128xf32>
    %25 = arith.divf %23, %24 : vector<8x128xf32>
    %26 = math.tanh %20 : vector<8x128xf32>
    %27 = arith.select %9, %25, %26 : vector<8x128xi1>, vector<8x128xf32>
    %28 = vector.extract_strided_slice %27 {offsets = [0, 0], sizes = [8, 32], strides = [1, 1]} : vector<8x128xf32> to vector<8x32xf32>
    %29 = vector.extract_strided_slice %27 {offsets = [0, 32], sizes = [8, 32], strides = [1, 1]} : vector<8x128xf32> to vector<8x32xf32>
    %30 = vector.extract_strided_slice %27 {offsets = [0, 64], sizes = [8, 32], strides = [1, 1]} : vector<8x128xf32> to vector<8x32xf32>
    %31 = vector.extract_strided_slice %27 {offsets = [0, 96], sizes = [8, 32], strides = [1, 1]} : vector<8x128xf32> to vector<8x32xf32>
    %32 = arith.mulf %29, %17 : vector<8x32xf32>
    %33 = arith.mulf %28, %31 : vector<8x32xf32>
    %34 = arith.addf %32, %33 : vector<8x32xf32>
    %35 = math.tanh %34 : vector<8x32xf32>
    %36 = arith.mulf %30, %35 : vector<8x32xf32>
    %37 = vector.extract_strided_slice %15 {offsets = [8, 0], sizes = [8, 128], strides = [1, 1]} : vector<64x128xf32> to vector<8x128xf32>
    %cst_16 = arith.constant dense<0.000000e+00> : vector<8x128xf32>
    %38 = tpu.matmul %36, %11, %cst_16 {dimension_numbers = #tpu.dot_dimension_numbers<[1], [0], [0], [1], [0, 0, 1, 1], [], []>} : vector<8x32xf32>, vector<32x128xf32>, vector<8x128xf32> -> vector<8x128xf32>
    %39 = arith.addf %37, %38 : vector<8x128xf32>
    %40 = arith.negf %39 : vector<8x128xf32>
    %41 = math.exp %40 : vector<8x128xf32>
    %cst_17 = arith.constant 1.000000e+00 : f32
    %42 = vector.broadcast %cst_17 : f32 to vector<8x128xf32>
    %43 = arith.addf %42, %41 : vector<8x128xf32>
    %44 = arith.divf %42, %43 : vector<8x128xf32>
    %45 = math.tanh %39 : vector<8x128xf32>
    %46 = arith.select %9, %44, %45 : vector<8x128xi1>, vector<8x128xf32>
    %47 = vector.extract_strided_slice %46 {offsets = [0, 0], sizes = [8, 32], strides = [1, 1]} : vector<8x128xf32> to vector<8x32xf32>
    %48 = vector.extract_strided_slice %46 {offsets = [0, 32], sizes = [8, 32], strides = [1, 1]} : vector<8x128xf32> to vector<8x32xf32>
    %49 = vector.extract_strided_slice %46 {offsets = [0, 64], sizes = [8, 32], strides = [1, 1]} : vector<8x128xf32> to vector<8x32xf32>
    %50 = vector.extract_strided_slice %46 {offsets = [0, 96], sizes = [8, 32], strides = [1, 1]} : vector<8x128xf32> to vector<8x32xf32>
    %51 = arith.mulf %48, %34 : vector<8x32xf32>
    %52 = arith.mulf %47, %50 : vector<8x32xf32>
    %53 = arith.addf %51, %52 : vector<8x32xf32>
    %54 = math.tanh %53 : vector<8x32xf32>
    %55 = arith.mulf %49, %54 : vector<8x32xf32>
    %56 = vector.extract_strided_slice %15 {offsets = [16, 0], sizes = [8, 128], strides = [1, 1]} : vector<64x128xf32> to vector<8x128xf32>
    %cst_18 = arith.constant dense<0.000000e+00> : vector<8x128xf32>
    %57 = tpu.matmul %55, %11, %cst_18 {dimension_numbers = #tpu.dot_dimension_numbers<[1], [0], [0], [1], [0, 0, 1, 1], [], []>} : vector<8x32xf32>, vector<32x128xf32>, vector<8x128xf32> -> vector<8x128xf32>
    %58 = arith.addf %56, %57 : vector<8x128xf32>
    %59 = arith.negf %58 : vector<8x128xf32>
    %60 = math.exp %59 : vector<8x128xf32>
    %cst_19 = arith.constant 1.000000e+00 : f32
    %61 = vector.broadcast %cst_19 : f32 to vector<8x128xf32>
    %62 = arith.addf %61, %60 : vector<8x128xf32>
    %63 = arith.divf %61, %62 : vector<8x128xf32>
    %64 = math.tanh %58 : vector<8x128xf32>
    %65 = arith.select %9, %63, %64 : vector<8x128xi1>, vector<8x128xf32>
    %66 = vector.extract_strided_slice %65 {offsets = [0, 0], sizes = [8, 32], strides = [1, 1]} : vector<8x128xf32> to vector<8x32xf32>
    %67 = vector.extract_strided_slice %65 {offsets = [0, 32], sizes = [8, 32], strides = [1, 1]} : vector<8x128xf32> to vector<8x32xf32>
    %68 = vector.extract_strided_slice %65 {offsets = [0, 64], sizes = [8, 32], strides = [1, 1]} : vector<8x128xf32> to vector<8x32xf32>
    %69 = vector.extract_strided_slice %65 {offsets = [0, 96], sizes = [8, 32], strides = [1, 1]} : vector<8x128xf32> to vector<8x32xf32>
    %70 = arith.mulf %67, %53 : vector<8x32xf32>
    %71 = arith.mulf %66, %69 : vector<8x32xf32>
    %72 = arith.addf %70, %71 : vector<8x32xf32>
    %73 = math.tanh %72 : vector<8x32xf32>
    %74 = arith.mulf %68, %73 : vector<8x32xf32>
    %75 = vector.extract_strided_slice %15 {offsets = [24, 0], sizes = [8, 128], strides = [1, 1]} : vector<64x128xf32> to vector<8x128xf32>
    %cst_20 = arith.constant dense<0.000000e+00> : vector<8x128xf32>
    %76 = tpu.matmul %74, %11, %cst_20 {dimension_numbers = #tpu.dot_dimension_numbers<[1], [0], [0], [1], [0, 0, 1, 1], [], []>} : vector<8x32xf32>, vector<32x128xf32>, vector<8x128xf32> -> vector<8x128xf32>
    %77 = arith.addf %75, %76 : vector<8x128xf32>
    %78 = arith.negf %77 : vector<8x128xf32>
    %79 = math.exp %78 : vector<8x128xf32>
    %cst_21 = arith.constant 1.000000e+00 : f32
    %80 = vector.broadcast %cst_21 : f32 to vector<8x128xf32>
    %81 = arith.addf %80, %79 : vector<8x128xf32>
    %82 = arith.divf %80, %81 : vector<8x128xf32>
    %83 = math.tanh %77 : vector<8x128xf32>
    %84 = arith.select %9, %82, %83 : vector<8x128xi1>, vector<8x128xf32>
    %85 = vector.extract_strided_slice %84 {offsets = [0, 0], sizes = [8, 32], strides = [1, 1]} : vector<8x128xf32> to vector<8x32xf32>
    %86 = vector.extract_strided_slice %84 {offsets = [0, 32], sizes = [8, 32], strides = [1, 1]} : vector<8x128xf32> to vector<8x32xf32>
    %87 = vector.extract_strided_slice %84 {offsets = [0, 64], sizes = [8, 32], strides = [1, 1]} : vector<8x128xf32> to vector<8x32xf32>
    %88 = vector.extract_strided_slice %84 {offsets = [0, 96], sizes = [8, 32], strides = [1, 1]} : vector<8x128xf32> to vector<8x32xf32>
    %89 = arith.mulf %86, %72 : vector<8x32xf32>
    %90 = arith.mulf %85, %88 : vector<8x32xf32>
    %91 = arith.addf %89, %90 : vector<8x32xf32>
    %92 = math.tanh %91 : vector<8x32xf32>
    %93 = arith.mulf %87, %92 : vector<8x32xf32>
    %94 = vector.extract_strided_slice %15 {offsets = [32, 0], sizes = [8, 128], strides = [1, 1]} : vector<64x128xf32> to vector<8x128xf32>
    %cst_22 = arith.constant dense<0.000000e+00> : vector<8x128xf32>
    %95 = tpu.matmul %93, %11, %cst_22 {dimension_numbers = #tpu.dot_dimension_numbers<[1], [0], [0], [1], [0, 0, 1, 1], [], []>} : vector<8x32xf32>, vector<32x128xf32>, vector<8x128xf32> -> vector<8x128xf32>
    %96 = arith.addf %94, %95 : vector<8x128xf32>
    %97 = arith.negf %96 : vector<8x128xf32>
    %98 = math.exp %97 : vector<8x128xf32>
    %cst_23 = arith.constant 1.000000e+00 : f32
    %99 = vector.broadcast %cst_23 : f32 to vector<8x128xf32>
    %100 = arith.addf %99, %98 : vector<8x128xf32>
    %101 = arith.divf %99, %100 : vector<8x128xf32>
    %102 = math.tanh %96 : vector<8x128xf32>
    %103 = arith.select %9, %101, %102 : vector<8x128xi1>, vector<8x128xf32>
    %104 = vector.extract_strided_slice %103 {offsets = [0, 0], sizes = [8, 32], strides = [1, 1]} : vector<8x128xf32> to vector<8x32xf32>
    %105 = vector.extract_strided_slice %103 {offsets = [0, 32], sizes = [8, 32], strides = [1, 1]} : vector<8x128xf32> to vector<8x32xf32>
    %106 = vector.extract_strided_slice %103 {offsets = [0, 64], sizes = [8, 32], strides = [1, 1]} : vector<8x128xf32> to vector<8x32xf32>
    %107 = vector.extract_strided_slice %103 {offsets = [0, 96], sizes = [8, 32], strides = [1, 1]} : vector<8x128xf32> to vector<8x32xf32>
    %108 = arith.mulf %105, %91 : vector<8x32xf32>
    %109 = arith.mulf %104, %107 : vector<8x32xf32>
    %110 = arith.addf %108, %109 : vector<8x32xf32>
    %111 = math.tanh %110 : vector<8x32xf32>
    %112 = arith.mulf %106, %111 : vector<8x32xf32>
    %113 = vector.extract_strided_slice %15 {offsets = [40, 0], sizes = [8, 128], strides = [1, 1]} : vector<64x128xf32> to vector<8x128xf32>
    %cst_24 = arith.constant dense<0.000000e+00> : vector<8x128xf32>
    %114 = tpu.matmul %112, %11, %cst_24 {dimension_numbers = #tpu.dot_dimension_numbers<[1], [0], [0], [1], [0, 0, 1, 1], [], []>} : vector<8x32xf32>, vector<32x128xf32>, vector<8x128xf32> -> vector<8x128xf32>
    %115 = arith.addf %113, %114 : vector<8x128xf32>
    %116 = arith.negf %115 : vector<8x128xf32>
    %117 = math.exp %116 : vector<8x128xf32>
    %cst_25 = arith.constant 1.000000e+00 : f32
    %118 = vector.broadcast %cst_25 : f32 to vector<8x128xf32>
    %119 = arith.addf %118, %117 : vector<8x128xf32>
    %120 = arith.divf %118, %119 : vector<8x128xf32>
    %121 = math.tanh %115 : vector<8x128xf32>
    %122 = arith.select %9, %120, %121 : vector<8x128xi1>, vector<8x128xf32>
    %123 = vector.extract_strided_slice %122 {offsets = [0, 0], sizes = [8, 32], strides = [1, 1]} : vector<8x128xf32> to vector<8x32xf32>
    %124 = vector.extract_strided_slice %122 {offsets = [0, 32], sizes = [8, 32], strides = [1, 1]} : vector<8x128xf32> to vector<8x32xf32>
    %125 = vector.extract_strided_slice %122 {offsets = [0, 64], sizes = [8, 32], strides = [1, 1]} : vector<8x128xf32> to vector<8x32xf32>
    %126 = vector.extract_strided_slice %122 {offsets = [0, 96], sizes = [8, 32], strides = [1, 1]} : vector<8x128xf32> to vector<8x32xf32>
    %127 = arith.mulf %124, %110 : vector<8x32xf32>
    %128 = arith.mulf %123, %126 : vector<8x32xf32>
    %129 = arith.addf %127, %128 : vector<8x32xf32>
    %130 = math.tanh %129 : vector<8x32xf32>
    %131 = arith.mulf %125, %130 : vector<8x32xf32>
    %132 = vector.extract_strided_slice %15 {offsets = [48, 0], sizes = [8, 128], strides = [1, 1]} : vector<64x128xf32> to vector<8x128xf32>
    %cst_26 = arith.constant dense<0.000000e+00> : vector<8x128xf32>
    %133 = tpu.matmul %131, %11, %cst_26 {dimension_numbers = #tpu.dot_dimension_numbers<[1], [0], [0], [1], [0, 0, 1, 1], [], []>} : vector<8x32xf32>, vector<32x128xf32>, vector<8x128xf32> -> vector<8x128xf32>
    %134 = arith.addf %132, %133 : vector<8x128xf32>
    %135 = arith.negf %134 : vector<8x128xf32>
    %136 = math.exp %135 : vector<8x128xf32>
    %cst_27 = arith.constant 1.000000e+00 : f32
    %137 = vector.broadcast %cst_27 : f32 to vector<8x128xf32>
    %138 = arith.addf %137, %136 : vector<8x128xf32>
    %139 = arith.divf %137, %138 : vector<8x128xf32>
    %140 = math.tanh %134 : vector<8x128xf32>
    %141 = arith.select %9, %139, %140 : vector<8x128xi1>, vector<8x128xf32>
    %142 = vector.extract_strided_slice %141 {offsets = [0, 0], sizes = [8, 32], strides = [1, 1]} : vector<8x128xf32> to vector<8x32xf32>
    %143 = vector.extract_strided_slice %141 {offsets = [0, 32], sizes = [8, 32], strides = [1, 1]} : vector<8x128xf32> to vector<8x32xf32>
    %144 = vector.extract_strided_slice %141 {offsets = [0, 64], sizes = [8, 32], strides = [1, 1]} : vector<8x128xf32> to vector<8x32xf32>
    %145 = vector.extract_strided_slice %141 {offsets = [0, 96], sizes = [8, 32], strides = [1, 1]} : vector<8x128xf32> to vector<8x32xf32>
    %146 = arith.mulf %143, %129 : vector<8x32xf32>
    %147 = arith.mulf %142, %145 : vector<8x32xf32>
    %148 = arith.addf %146, %147 : vector<8x32xf32>
    %149 = math.tanh %148 : vector<8x32xf32>
    %150 = arith.mulf %144, %149 : vector<8x32xf32>
    %151 = vector.extract_strided_slice %15 {offsets = [56, 0], sizes = [8, 128], strides = [1, 1]} : vector<64x128xf32> to vector<8x128xf32>
    %cst_28 = arith.constant dense<0.000000e+00> : vector<8x128xf32>
    %152 = tpu.matmul %150, %11, %cst_28 {dimension_numbers = #tpu.dot_dimension_numbers<[1], [0], [0], [1], [0, 0, 1, 1], [], []>} : vector<8x32xf32>, vector<32x128xf32>, vector<8x128xf32> -> vector<8x128xf32>
    %153 = arith.addf %151, %152 : vector<8x128xf32>
    %154 = arith.negf %153 : vector<8x128xf32>
    %155 = math.exp %154 : vector<8x128xf32>
    %cst_29 = arith.constant 1.000000e+00 : f32
    %156 = vector.broadcast %cst_29 : f32 to vector<8x128xf32>
    %157 = arith.addf %156, %155 : vector<8x128xf32>
    %158 = arith.divf %156, %157 : vector<8x128xf32>
    %159 = math.tanh %153 : vector<8x128xf32>
    %160 = arith.select %9, %158, %159 : vector<8x128xi1>, vector<8x128xf32>
    %161 = vector.extract_strided_slice %160 {offsets = [0, 0], sizes = [8, 32], strides = [1, 1]} : vector<8x128xf32> to vector<8x32xf32>
    %162 = vector.extract_strided_slice %160 {offsets = [0, 32], sizes = [8, 32], strides = [1, 1]} : vector<8x128xf32> to vector<8x32xf32>
    %163 = vector.extract_strided_slice %160 {offsets = [0, 64], sizes = [8, 32], strides = [1, 1]} : vector<8x128xf32> to vector<8x32xf32>
    %164 = vector.extract_strided_slice %160 {offsets = [0, 96], sizes = [8, 32], strides = [1, 1]} : vector<8x128xf32> to vector<8x32xf32>
    %165 = arith.mulf %162, %148 : vector<8x32xf32>
    %166 = arith.mulf %161, %164 : vector<8x32xf32>
    %167 = arith.addf %165, %166 : vector<8x32xf32>
    %168 = math.tanh %167 : vector<8x32xf32>
    %169 = arith.mulf %163, %168 : vector<8x32xf32>
    %170 = tpu.concatenate %36, %55, %74, %93, %112, %131, %150, %169 in 0 : vector<8x32xf32>, vector<8x32xf32>, vector<8x32xf32>, vector<8x32xf32>, vector<8x32xf32>, vector<8x32xf32>, vector<8x32xf32>, vector<8x32xf32> -> vector<64x32xf32>
    %c0_30 = arith.constant 0 : index
    %c0_31 = arith.constant 0 : index
    %171 = vector.load %arg6[%c0_30, %c0_31] : memref<32x128xf32, #tpu.memory_space<vmem>>, vector<32x128xf32>
    %c0_32 = arith.constant 0 : index
    %c0_33 = arith.constant 0 : index
    %172 = vector.load %arg7[%c0_32, %c0_33] : memref<32x128xf32, #tpu.memory_space<vmem>>, vector<32x128xf32>
    %c0_34 = arith.constant 0 : index
    %c0_35 = arith.constant 0 : index
    %173 = vector.load %arg8[%c0_34, %c0_35] : memref<1x128xf32, #tpu.memory_space<vmem>>, vector<1x128xf32>
    %cst_36 = arith.constant dense<0.000000e+00> : vector<64x128xf32>
    %174 = tpu.matmul %170, %171, %cst_36 {dimension_numbers = #tpu.dot_dimension_numbers<[1], [0], [0], [1], [0, 0, 1, 1], [], []>} : vector<64x32xf32>, vector<32x128xf32>, vector<64x128xf32> -> vector<64x128xf32>
    %175 = vector.broadcast %173 : vector<1x128xf32> to vector<64x128xf32>
    %176 = arith.addf %174, %175 : vector<64x128xf32>
    %cst_37 = arith.constant 0.000000e+00 : f32
    %177 = vector.broadcast %cst_37 : f32 to vector<8x32xf32>
    %cst_38 = arith.constant 0.000000e+00 : f32
    %178 = vector.broadcast %cst_38 : f32 to vector<8x32xf32>
    %179 = vector.extract_strided_slice %176 {offsets = [0, 0], sizes = [8, 128], strides = [1, 1]} : vector<64x128xf32> to vector<8x128xf32>
    %cst_39 = arith.constant dense<0.000000e+00> : vector<8x128xf32>
    %180 = tpu.matmul %177, %172, %cst_39 {dimension_numbers = #tpu.dot_dimension_numbers<[1], [0], [0], [1], [0, 0, 1, 1], [], []>} : vector<8x32xf32>, vector<32x128xf32>, vector<8x128xf32> -> vector<8x128xf32>
    %181 = arith.addf %179, %180 : vector<8x128xf32>
    %182 = arith.negf %181 : vector<8x128xf32>
    %183 = math.exp %182 : vector<8x128xf32>
    %cst_40 = arith.constant 1.000000e+00 : f32
    %184 = vector.broadcast %cst_40 : f32 to vector<8x128xf32>
    %185 = arith.addf %184, %183 : vector<8x128xf32>
    %186 = arith.divf %184, %185 : vector<8x128xf32>
    %187 = math.tanh %181 : vector<8x128xf32>
    %188 = arith.select %9, %186, %187 : vector<8x128xi1>, vector<8x128xf32>
    %189 = vector.extract_strided_slice %188 {offsets = [0, 0], sizes = [8, 32], strides = [1, 1]} : vector<8x128xf32> to vector<8x32xf32>
    %190 = vector.extract_strided_slice %188 {offsets = [0, 32], sizes = [8, 32], strides = [1, 1]} : vector<8x128xf32> to vector<8x32xf32>
    %191 = vector.extract_strided_slice %188 {offsets = [0, 64], sizes = [8, 32], strides = [1, 1]} : vector<8x128xf32> to vector<8x32xf32>
    %192 = vector.extract_strided_slice %188 {offsets = [0, 96], sizes = [8, 32], strides = [1, 1]} : vector<8x128xf32> to vector<8x32xf32>
    %193 = arith.mulf %190, %178 : vector<8x32xf32>
    %194 = arith.mulf %189, %192 : vector<8x32xf32>
    %195 = arith.addf %193, %194 : vector<8x32xf32>
    %196 = math.tanh %195 : vector<8x32xf32>
    %197 = arith.mulf %191, %196 : vector<8x32xf32>
    %198 = vector.extract_strided_slice %176 {offsets = [8, 0], sizes = [8, 128], strides = [1, 1]} : vector<64x128xf32> to vector<8x128xf32>
    %cst_41 = arith.constant dense<0.000000e+00> : vector<8x128xf32>
    %199 = tpu.matmul %197, %172, %cst_41 {dimension_numbers = #tpu.dot_dimension_numbers<[1], [0], [0], [1], [0, 0, 1, 1], [], []>} : vector<8x32xf32>, vector<32x128xf32>, vector<8x128xf32> -> vector<8x128xf32>
    %200 = arith.addf %198, %199 : vector<8x128xf32>
    %201 = arith.negf %200 : vector<8x128xf32>
    %202 = math.exp %201 : vector<8x128xf32>
    %cst_42 = arith.constant 1.000000e+00 : f32
    %203 = vector.broadcast %cst_42 : f32 to vector<8x128xf32>
    %204 = arith.addf %203, %202 : vector<8x128xf32>
    %205 = arith.divf %203, %204 : vector<8x128xf32>
    %206 = math.tanh %200 : vector<8x128xf32>
    %207 = arith.select %9, %205, %206 : vector<8x128xi1>, vector<8x128xf32>
    %208 = vector.extract_strided_slice %207 {offsets = [0, 0], sizes = [8, 32], strides = [1, 1]} : vector<8x128xf32> to vector<8x32xf32>
    %209 = vector.extract_strided_slice %207 {offsets = [0, 32], sizes = [8, 32], strides = [1, 1]} : vector<8x128xf32> to vector<8x32xf32>
    %210 = vector.extract_strided_slice %207 {offsets = [0, 64], sizes = [8, 32], strides = [1, 1]} : vector<8x128xf32> to vector<8x32xf32>
    %211 = vector.extract_strided_slice %207 {offsets = [0, 96], sizes = [8, 32], strides = [1, 1]} : vector<8x128xf32> to vector<8x32xf32>
    %212 = arith.mulf %209, %195 : vector<8x32xf32>
    %213 = arith.mulf %208, %211 : vector<8x32xf32>
    %214 = arith.addf %212, %213 : vector<8x32xf32>
    %215 = math.tanh %214 : vector<8x32xf32>
    %216 = arith.mulf %210, %215 : vector<8x32xf32>
    %217 = vector.extract_strided_slice %176 {offsets = [16, 0], sizes = [8, 128], strides = [1, 1]} : vector<64x128xf32> to vector<8x128xf32>
    %cst_43 = arith.constant dense<0.000000e+00> : vector<8x128xf32>
    %218 = tpu.matmul %216, %172, %cst_43 {dimension_numbers = #tpu.dot_dimension_numbers<[1], [0], [0], [1], [0, 0, 1, 1], [], []>} : vector<8x32xf32>, vector<32x128xf32>, vector<8x128xf32> -> vector<8x128xf32>
    %219 = arith.addf %217, %218 : vector<8x128xf32>
    %220 = arith.negf %219 : vector<8x128xf32>
    %221 = math.exp %220 : vector<8x128xf32>
    %cst_44 = arith.constant 1.000000e+00 : f32
    %222 = vector.broadcast %cst_44 : f32 to vector<8x128xf32>
    %223 = arith.addf %222, %221 : vector<8x128xf32>
    %224 = arith.divf %222, %223 : vector<8x128xf32>
    %225 = math.tanh %219 : vector<8x128xf32>
    %226 = arith.select %9, %224, %225 : vector<8x128xi1>, vector<8x128xf32>
    %227 = vector.extract_strided_slice %226 {offsets = [0, 0], sizes = [8, 32], strides = [1, 1]} : vector<8x128xf32> to vector<8x32xf32>
    %228 = vector.extract_strided_slice %226 {offsets = [0, 32], sizes = [8, 32], strides = [1, 1]} : vector<8x128xf32> to vector<8x32xf32>
    %229 = vector.extract_strided_slice %226 {offsets = [0, 64], sizes = [8, 32], strides = [1, 1]} : vector<8x128xf32> to vector<8x32xf32>
    %230 = vector.extract_strided_slice %226 {offsets = [0, 96], sizes = [8, 32], strides = [1, 1]} : vector<8x128xf32> to vector<8x32xf32>
    %231 = arith.mulf %228, %214 : vector<8x32xf32>
    %232 = arith.mulf %227, %230 : vector<8x32xf32>
    %233 = arith.addf %231, %232 : vector<8x32xf32>
    %234 = math.tanh %233 : vector<8x32xf32>
    %235 = arith.mulf %229, %234 : vector<8x32xf32>
    %236 = vector.extract_strided_slice %176 {offsets = [24, 0], sizes = [8, 128], strides = [1, 1]} : vector<64x128xf32> to vector<8x128xf32>
    %cst_45 = arith.constant dense<0.000000e+00> : vector<8x128xf32>
    %237 = tpu.matmul %235, %172, %cst_45 {dimension_numbers = #tpu.dot_dimension_numbers<[1], [0], [0], [1], [0, 0, 1, 1], [], []>} : vector<8x32xf32>, vector<32x128xf32>, vector<8x128xf32> -> vector<8x128xf32>
    %238 = arith.addf %236, %237 : vector<8x128xf32>
    %239 = arith.negf %238 : vector<8x128xf32>
    %240 = math.exp %239 : vector<8x128xf32>
    %cst_46 = arith.constant 1.000000e+00 : f32
    %241 = vector.broadcast %cst_46 : f32 to vector<8x128xf32>
    %242 = arith.addf %241, %240 : vector<8x128xf32>
    %243 = arith.divf %241, %242 : vector<8x128xf32>
    %244 = math.tanh %238 : vector<8x128xf32>
    %245 = arith.select %9, %243, %244 : vector<8x128xi1>, vector<8x128xf32>
    %246 = vector.extract_strided_slice %245 {offsets = [0, 0], sizes = [8, 32], strides = [1, 1]} : vector<8x128xf32> to vector<8x32xf32>
    %247 = vector.extract_strided_slice %245 {offsets = [0, 32], sizes = [8, 32], strides = [1, 1]} : vector<8x128xf32> to vector<8x32xf32>
    %248 = vector.extract_strided_slice %245 {offsets = [0, 64], sizes = [8, 32], strides = [1, 1]} : vector<8x128xf32> to vector<8x32xf32>
    %249 = vector.extract_strided_slice %245 {offsets = [0, 96], sizes = [8, 32], strides = [1, 1]} : vector<8x128xf32> to vector<8x32xf32>
    %250 = arith.mulf %247, %233 : vector<8x32xf32>
    %251 = arith.mulf %246, %249 : vector<8x32xf32>
    %252 = arith.addf %250, %251 : vector<8x32xf32>
    %253 = math.tanh %252 : vector<8x32xf32>
    %254 = arith.mulf %248, %253 : vector<8x32xf32>
    %255 = vector.extract_strided_slice %176 {offsets = [32, 0], sizes = [8, 128], strides = [1, 1]} : vector<64x128xf32> to vector<8x128xf32>
    %cst_47 = arith.constant dense<0.000000e+00> : vector<8x128xf32>
    %256 = tpu.matmul %254, %172, %cst_47 {dimension_numbers = #tpu.dot_dimension_numbers<[1], [0], [0], [1], [0, 0, 1, 1], [], []>} : vector<8x32xf32>, vector<32x128xf32>, vector<8x128xf32> -> vector<8x128xf32>
    %257 = arith.addf %255, %256 : vector<8x128xf32>
    %258 = arith.negf %257 : vector<8x128xf32>
    %259 = math.exp %258 : vector<8x128xf32>
    %cst_48 = arith.constant 1.000000e+00 : f32
    %260 = vector.broadcast %cst_48 : f32 to vector<8x128xf32>
    %261 = arith.addf %260, %259 : vector<8x128xf32>
    %262 = arith.divf %260, %261 : vector<8x128xf32>
    %263 = math.tanh %257 : vector<8x128xf32>
    %264 = arith.select %9, %262, %263 : vector<8x128xi1>, vector<8x128xf32>
    %265 = vector.extract_strided_slice %264 {offsets = [0, 0], sizes = [8, 32], strides = [1, 1]} : vector<8x128xf32> to vector<8x32xf32>
    %266 = vector.extract_strided_slice %264 {offsets = [0, 32], sizes = [8, 32], strides = [1, 1]} : vector<8x128xf32> to vector<8x32xf32>
    %267 = vector.extract_strided_slice %264 {offsets = [0, 64], sizes = [8, 32], strides = [1, 1]} : vector<8x128xf32> to vector<8x32xf32>
    %268 = vector.extract_strided_slice %264 {offsets = [0, 96], sizes = [8, 32], strides = [1, 1]} : vector<8x128xf32> to vector<8x32xf32>
    %269 = arith.mulf %266, %252 : vector<8x32xf32>
    %270 = arith.mulf %265, %268 : vector<8x32xf32>
    %271 = arith.addf %269, %270 : vector<8x32xf32>
    %272 = math.tanh %271 : vector<8x32xf32>
    %273 = arith.mulf %267, %272 : vector<8x32xf32>
    %274 = vector.extract_strided_slice %176 {offsets = [40, 0], sizes = [8, 128], strides = [1, 1]} : vector<64x128xf32> to vector<8x128xf32>
    %cst_49 = arith.constant dense<0.000000e+00> : vector<8x128xf32>
    %275 = tpu.matmul %273, %172, %cst_49 {dimension_numbers = #tpu.dot_dimension_numbers<[1], [0], [0], [1], [0, 0, 1, 1], [], []>} : vector<8x32xf32>, vector<32x128xf32>, vector<8x128xf32> -> vector<8x128xf32>
    %276 = arith.addf %274, %275 : vector<8x128xf32>
    %277 = arith.negf %276 : vector<8x128xf32>
    %278 = math.exp %277 : vector<8x128xf32>
    %cst_50 = arith.constant 1.000000e+00 : f32
    %279 = vector.broadcast %cst_50 : f32 to vector<8x128xf32>
    %280 = arith.addf %279, %278 : vector<8x128xf32>
    %281 = arith.divf %279, %280 : vector<8x128xf32>
    %282 = math.tanh %276 : vector<8x128xf32>
    %283 = arith.select %9, %281, %282 : vector<8x128xi1>, vector<8x128xf32>
    %284 = vector.extract_strided_slice %283 {offsets = [0, 0], sizes = [8, 32], strides = [1, 1]} : vector<8x128xf32> to vector<8x32xf32>
    %285 = vector.extract_strided_slice %283 {offsets = [0, 32], sizes = [8, 32], strides = [1, 1]} : vector<8x128xf32> to vector<8x32xf32>
    %286 = vector.extract_strided_slice %283 {offsets = [0, 64], sizes = [8, 32], strides = [1, 1]} : vector<8x128xf32> to vector<8x32xf32>
    %287 = vector.extract_strided_slice %283 {offsets = [0, 96], sizes = [8, 32], strides = [1, 1]} : vector<8x128xf32> to vector<8x32xf32>
    %288 = arith.mulf %285, %271 : vector<8x32xf32>
    %289 = arith.mulf %284, %287 : vector<8x32xf32>
    %290 = arith.addf %288, %289 : vector<8x32xf32>
    %291 = math.tanh %290 : vector<8x32xf32>
    %292 = arith.mulf %286, %291 : vector<8x32xf32>
    %293 = vector.extract_strided_slice %176 {offsets = [48, 0], sizes = [8, 128], strides = [1, 1]} : vector<64x128xf32> to vector<8x128xf32>
    %cst_51 = arith.constant dense<0.000000e+00> : vector<8x128xf32>
    %294 = tpu.matmul %292, %172, %cst_51 {dimension_numbers = #tpu.dot_dimension_numbers<[1], [0], [0], [1], [0, 0, 1, 1], [], []>} : vector<8x32xf32>, vector<32x128xf32>, vector<8x128xf32> -> vector<8x128xf32>
    %295 = arith.addf %293, %294 : vector<8x128xf32>
    %296 = arith.negf %295 : vector<8x128xf32>
    %297 = math.exp %296 : vector<8x128xf32>
    %cst_52 = arith.constant 1.000000e+00 : f32
    %298 = vector.broadcast %cst_52 : f32 to vector<8x128xf32>
    %299 = arith.addf %298, %297 : vector<8x128xf32>
    %300 = arith.divf %298, %299 : vector<8x128xf32>
    %301 = math.tanh %295 : vector<8x128xf32>
    %302 = arith.select %9, %300, %301 : vector<8x128xi1>, vector<8x128xf32>
    %303 = vector.extract_strided_slice %302 {offsets = [0, 0], sizes = [8, 32], strides = [1, 1]} : vector<8x128xf32> to vector<8x32xf32>
    %304 = vector.extract_strided_slice %302 {offsets = [0, 32], sizes = [8, 32], strides = [1, 1]} : vector<8x128xf32> to vector<8x32xf32>
    %305 = vector.extract_strided_slice %302 {offsets = [0, 64], sizes = [8, 32], strides = [1, 1]} : vector<8x128xf32> to vector<8x32xf32>
    %306 = vector.extract_strided_slice %302 {offsets = [0, 96], sizes = [8, 32], strides = [1, 1]} : vector<8x128xf32> to vector<8x32xf32>
    %307 = arith.mulf %304, %290 : vector<8x32xf32>
    %308 = arith.mulf %303, %306 : vector<8x32xf32>
    %309 = arith.addf %307, %308 : vector<8x32xf32>
    %310 = math.tanh %309 : vector<8x32xf32>
    %311 = arith.mulf %305, %310 : vector<8x32xf32>
    %312 = vector.extract_strided_slice %176 {offsets = [56, 0], sizes = [8, 128], strides = [1, 1]} : vector<64x128xf32> to vector<8x128xf32>
    %cst_53 = arith.constant dense<0.000000e+00> : vector<8x128xf32>
    %313 = tpu.matmul %311, %172, %cst_53 {dimension_numbers = #tpu.dot_dimension_numbers<[1], [0], [0], [1], [0, 0, 1, 1], [], []>} : vector<8x32xf32>, vector<32x128xf32>, vector<8x128xf32> -> vector<8x128xf32>
    %314 = arith.addf %312, %313 : vector<8x128xf32>
    %315 = arith.negf %314 : vector<8x128xf32>
    %316 = math.exp %315 : vector<8x128xf32>
    %cst_54 = arith.constant 1.000000e+00 : f32
    %317 = vector.broadcast %cst_54 : f32 to vector<8x128xf32>
    %318 = arith.addf %317, %316 : vector<8x128xf32>
    %319 = arith.divf %317, %318 : vector<8x128xf32>
    %320 = math.tanh %314 : vector<8x128xf32>
    %321 = arith.select %9, %319, %320 : vector<8x128xi1>, vector<8x128xf32>
    %322 = vector.extract_strided_slice %321 {offsets = [0, 0], sizes = [8, 32], strides = [1, 1]} : vector<8x128xf32> to vector<8x32xf32>
    %323 = vector.extract_strided_slice %321 {offsets = [0, 32], sizes = [8, 32], strides = [1, 1]} : vector<8x128xf32> to vector<8x32xf32>
    %324 = vector.extract_strided_slice %321 {offsets = [0, 64], sizes = [8, 32], strides = [1, 1]} : vector<8x128xf32> to vector<8x32xf32>
    %325 = vector.extract_strided_slice %321 {offsets = [0, 96], sizes = [8, 32], strides = [1, 1]} : vector<8x128xf32> to vector<8x32xf32>
    %326 = arith.mulf %323, %309 : vector<8x32xf32>
    %327 = arith.mulf %322, %325 : vector<8x32xf32>
    %328 = arith.addf %326, %327 : vector<8x32xf32>
    %329 = math.tanh %328 : vector<8x32xf32>
    %330 = arith.mulf %324, %329 : vector<8x32xf32>
    %331 = tpu.concatenate %197, %216, %235, %254, %273, %292, %311, %330 in 0 : vector<8x32xf32>, vector<8x32xf32>, vector<8x32xf32>, vector<8x32xf32>, vector<8x32xf32>, vector<8x32xf32>, vector<8x32xf32>, vector<8x32xf32> -> vector<64x32xf32>
    %c0_55 = arith.constant 0 : index
    %c0_56 = arith.constant 0 : index
    %332 = vector.load %arg9[%c0_55, %c0_56] : memref<32x128xf32, #tpu.memory_space<vmem>>, vector<32x128xf32>
    %cst_57 = arith.constant dense<0.000000e+00> : vector<64x128xf32>
    %333 = tpu.matmul %331, %332, %cst_57 {dimension_numbers = #tpu.dot_dimension_numbers<[1], [0], [0], [1], [0, 0, 1, 1], [], []>} : vector<64x32xf32>, vector<32x128xf32>, vector<64x128xf32> -> vector<64x128xf32>
    %c0_58 = arith.constant 0 : index
    %c0_59 = arith.constant 0 : index
    %334 = vector.load %arg10[%c0_58, %c0_59] : memref<1x128xf32, #tpu.memory_space<vmem>>, vector<1x128xf32>
    %335 = vector.broadcast %334 : vector<1x128xf32> to vector<64x128xf32>
    %336 = arith.addf %333, %335 : vector<64x128xf32>
    %c0_60 = arith.constant 0 : index
    %c0_61 = arith.constant 0 : index
    %337 = vector.load %arg11[%c0_60, %c0_61] : memref<64x128xf32, #tpu.memory_space<vmem>>, vector<64x128xf32>
    tpu.vector_store %arg11[%c0_60, %c0_61], %336 {strides = array<i32>} : memref<64x128xf32, #tpu.memory_space<vmem>>, vector<64x128xf32>,
    return
  }
}

</mosaic_0001>

<llo_original>
// kernel: rnn_encoder_forward.1
$region0: #{rnn_encoder_forward.1}
  #allocation0 [shape = 'u32[]', space=smem, size = 0x4, offset = 0x4, fixed_abs, tag = 'smem constant byte address 0x4 - core index']
  #allocation1 [shape = 'u32[144,128]{1,0:T(1,128)}', space=vmem, size = 0x12000, scoped, tag = 'internal scratch']
  %s0 = inlined_call_operand.vmem [shape: f32[64,4], index: 0, kind: input, shape index: {}]
  %s1 = inlined_call_operand.vmem [shape: f32[4,32], index: 1, kind: input, shape index: {}]
  %s2 = inlined_call_operand.vmem [shape: f32[1,32], index: 2, kind: input, shape index: {}]
  %s3 = inlined_call_operand.vmem [shape: f32[32,128], index: 3, kind: input, shape index: {}]
  %s4 = inlined_call_operand.vmem [shape: f32[32,128], index: 4, kind: input, shape index: {}]
  %s5 = inlined_call_operand.vmem [shape: f32[1,128], index: 5, kind: input, shape index: {}]
  %s6 = inlined_call_operand.vmem [shape: f32[32,128], index: 6, kind: input, shape index: {}]
  %s7 = inlined_call_operand.vmem [shape: f32[32,128], index: 7, kind: input, shape index: {}]
  %s8 = inlined_call_operand.vmem [shape: f32[1,128], index: 8, kind: input, shape index: {}]
  %s9 = inlined_call_operand.vmem [shape: f32[32,128], index: 9, kind: input, shape index: {}]
  %s10 = inlined_call_operand.vmem [shape: f32[1,128], index: 10, kind: input, shape index: {}]
  %s11 = inlined_call_operand.vmem [shape: f32[64,128], index: 11, kind: output, shape index: {}]
  %s12 = sld [smem:[#allocation0]]
  $region54: #{rnn_encoder_forward.1} parent=0
    _
  %s14 = ssub.s32 1, %s12
  %s15 = scalar_select 0, %s14, %s12
  // Predicated region
  $region2: #{rnn_encoder_forward.1} parent=0 // pred_check
    _
  $region3: #{rnn_encoder_forward.1} parent=0 // pred_check_branch
    %17 = sbr.rel (0) target = $region5
  $region4: #{rnn_encoder_forward.1} parent=0 // pred_region
    _
  $region5: #{rnn_encoder_forward.1} parent=0 // pred_fallthru
    _
  // Predicated region
  $region6: #{rnn_encoder_forward.1} parent=0 // pred_check
    _
  $region7: #{rnn_encoder_forward.1} parent=0 // pred_check_branch
    %19 = sbr.rel (0) target = $region9
  $region8: #{rnn_encoder_forward.1} parent=0 // pred_region
    _
  $region9: #{rnn_encoder_forward.1} parent=0 // pred_fallthru
    _
  // Predicated region
  $region10: #{rnn_encoder_forward.1} parent=0 // pred_check
    _
  $region11: #{rnn_encoder_forward.1} parent=0 // pred_check_branch
    %21 = sbr.rel (0) target = $region13
  $region12: #{rnn_encoder_forward.1} parent=0 // pred_region
    _
  $region13: #{rnn_encoder_forward.1} parent=0 // pred_fallthru
    _
  // Predicated region
  $region14: #{rnn_encoder_forward.1} parent=0 // pred_check
    _
  $region15: #{rnn_encoder_forward.1} parent=0 // pred_check_branch
    %23 = sbr.rel (0) target = $region17
  $region16: #{rnn_encoder_forward.1} parent=0 // pred_region
    _
  $region17: #{rnn_encoder_forward.1} parent=0 // pred_fallthru
    _
  // Predicated region
  $region18: #{rnn_encoder_forward.1} parent=0 // pred_check
    _
  $region19: #{rnn_encoder_forward.1} parent=0 // pred_check_branch
    %25 = sbr.rel (0) target = $region21
  $region20: #{rnn_encoder_forward.1} parent=0 // pred_region
    _
  $region21: #{rnn_encoder_forward.1} parent=0 // pred_fallthru
    _
  // Predicated region
  $region22: #{rnn_encoder_forward.1} parent=0 // pred_check
    _
  $region23: #{rnn_encoder_forward.1} parent=0 // pred_check_branch
    %27 = sbr.rel (0) target = $region25
  $region24: #{rnn_encoder_forward.1} parent=0 // pred_region
    _
  $region25: #{rnn_encoder_forward.1} parent=0 // pred_fallthru
    _
  // Predicated region
  $region26: #{rnn_encoder_forward.1} parent=0 // pred_check
    _
  $region27: #{rnn_encoder_forward.1} parent=0 // pred_check_branch
    %29 = sbr.rel (0) target = $region29
  $region28: #{rnn_encoder_forward.1} parent=0 // pred_region
    _
  $region29: #{rnn_encoder_forward.1} parent=0 // pred_fallthru
    _
  // Predicated region
  $region30: #{rnn_encoder_forward.1} parent=0 // pred_check
    _
  $region31: #{rnn_encoder_forward.1} parent=0 // pred_check_branch
    %31 = sbr.rel (0) target = $region33
  $region32: #{rnn_encoder_forward.1} parent=0 // pred_region
    _
  $region33: #{rnn_encoder_forward.1} parent=0 // pred_fallthru
    _
  // Predicated region
  $region34: #{rnn_encoder_forward.1} parent=0 // pred_check
    _
  $region35: #{rnn_encoder_forward.1} parent=0 // pred_check_branch
    %33 = sbr.rel (0) target = $region37
  $region36: #{rnn_encoder_forward.1} parent=0 // pred_region
    _
  $region37: #{rnn_encoder_forward.1} parent=0 // pred_fallthru
    _
  // Predicated region
  $region38: #{rnn_encoder_forward.1} parent=0 // pred_check
    _
  $region39: #{rnn_encoder_forward.1} parent=0 // pred_check_branch
    %35 = sbr.rel (0) target = $region41
  $region40: #{rnn_encoder_forward.1} parent=0 // pred_region
    _
  $region41: #{rnn_encoder_forward.1} parent=0 // pred_fallthru
    _
  // Predicated region
  $region42: #{rnn_encoder_forward.1} parent=0 // pred_check
    _
  $region43: #{rnn_encoder_forward.1} parent=0 // pred_check_branch
    %37 = sbr.rel (0) target = $region45
  $region44: #{rnn_encoder_forward.1} parent=0 // pred_region
    _
  $region45: #{rnn_encoder_forward.1} parent=0 // pred_fallthru
    _
  %v38 = vld [vmem:[%s0] sm:$0xff]
  %v39 = vld [vmem:[%s0 + $0x8] sm:$0xff]
  %v40 = vld [vmem:[%s0 + $0x10] sm:$0xff]
  %v41 = vld [vmem:[%s0 + $0x18] sm:$0xff]
  %v42 = vld [vmem:[%s0 + $0x20] sm:$0xff]
  %v43 = vld [vmem:[%s0 + $0x28] sm:$0xff]
  %v44 = vld [vmem:[%s0 + $0x30] sm:$0xff]
  %v45 = vld [vmem:[%s0 + $0x38] sm:$0xff]
  %v46 = vld [vmem:[%s1] sm:$0xf]
  %v47 = vld [vmem:[%s2] sm:$0x1]
  %v49 = vlaneseq
  %v50 = vshrl.u32 %v49, 7
  %v51 = vsub.s32 0, %v50
  %v52 = vrot.slane %v47, %v51
  %vm54 = vcmask 31744
  %v56 = vsel %vm54, %v38, 0
  %v59 = vsel %vm54, %v39, 0
  %v62 = vsel %vm54, %v40, 0
  %v65 = vsel %vm54, %v41, 0
  %v68 = vsel %vm54, %v42, 0
  %v71 = vsel %vm54, %v43, 0
  %v74 = vsel %vm54, %v44, 0
  %v77 = vsel %vm54, %v45, 0
  %vm79 = vcmask 1043456
  %v81 = vsel %vm79, %v46, 0
  %83 = vmatprep.subr.mxu0 0.0
  %84 = vmatpush1.msra.mxu0 %v81
  %85 = vmatprep.subr.mxu0 0.0
  %86 = vmatpush1.msra.mxu0 0.0
  %87 = vmatprep.subr.mxu0 0.0
  %88 = vmatpush1.msra.mxu0 0.0
  %89 = vmatprep.subr.mxu0 0.0
  %90 = vmatpush1.msra.mxu0 0.0
  %91 = vmatprep.subr.mxu0 0.0
  %92 = vmatpush1.msra.mxu0 0.0
  %93 = vmatprep.subr.mxu0 0.0
  %94 = vmatpush1.msra.mxu0 0.0
  %95 = vmatprep.subr.mxu0 0.0
  %96 = vmatpush1.msra.mxu0 0.0
  %97 = vmatprep.subr.mxu0 0.0
  %98 = vmatpush1.msra.mxu0 0.0
  %99 = vmatprep.subr.mxu0 0.0
  %100 = vmatpush1.msra.mxu0 0.0
  %101 = vmatprep.subr.mxu0 0.0
  %102 = vmatpush1.msra.mxu0 0.0
  %103 = vmatprep.subr.mxu0 0.0
  %104 = vmatpush1.msra.mxu0 0.0
  %105 = vmatprep.subr.mxu0 0.0
  %106 = vmatpush1.msra.mxu0 0.0
  %107 = vmatprep.subr.mxu0 0.0
  %108 = vmatpush1.msra.mxu0 0.0
  %109 = vmatprep.subr.mxu0 0.0
  %110 = vmatpush1.msra.mxu0 0.0
  %111 = vmatprep.subr.mxu0 0.0
  %112 = vmatpush1.msra.mxu0 0.0
  %113 = vmatprep.subr.mxu0 0.0
  %114 = vmatpush1.msra.mxu0 0.0
  %115 = vmatprep.subr.mxu0 0.0
  %116 = vmatpush1.msra.mxu0 0.0
  %117 = vmatprep.subr.mxu0 0.0
  %118 = vmatpush1.msra.mxu0 0.0
  %119 = vmatprep.subr.mxu0 0.0
  %120 = vmatpush1.msra.mxu0 0.0
  %121 = vmatprep.subr.mxu0 0.0
  %122 = vmatpush1.msra.mxu0 0.0
  %123 = vmatprep.subr.mxu0 0.0
  %124 = vmatpush1.msra.mxu0 0.0
  %125 = vmatprep.subr.mxu0 0.0
  %126 = vmatpush1.msra.mxu0 0.0
  %127 = vmatprep.subr.mxu0 0.0
  %128 = vmatpush1.msra.mxu0 0.0
  %129 = vmatprep.subr.mxu0 0.0
  %130 = vmatpush1.msra.mxu0 0.0
  %131 = vmatprep.subr.mxu0 0.0
  %132 = vmatpush1.msra.mxu0 0.0
  %133 = vmatprep.subr.mxu0 0.0
  %134 = vmatpush1.msra.mxu0 0.0
  %135 = vmatprep.subr.mxu0 0.0
  %136 = vmatpush1.msra.mxu0 0.0
  %137 = vmatprep.subr.mxu0 0.0
  %138 = vmatpush1.msra.mxu0 0.0
  %139 = vmatprep.subr.mxu0 0.0
  %140 = vmatpush1.msra.mxu0 0.0
  %141 = vmatprep.subr.mxu0 0.0
  %142 = vmatpush1.msra.mxu0 0.0
  %143 = vmatprep.subr.mxu0 0.0
  %144 = vmatpush1.msra.mxu0 0.0
  %145 = vmatprep.subr.mxu0 0.0
  %146 = vmatpush1.msra.mxu0 0.0
  %147 = vmatprep.mubr.f32.mxu0 0.0
  %148 = vmatmul.mubr.f32.gmra.mrb[0].mxu0 %v56
  %v149 = vpop.f32.mrb[0].mxu0
  %v150 = vadd.f32 %v52, %v149
  %v151 = vpop.f32.mrb[0].mxu0
  %152 = vmatprep.mubr.f32.mxu0 0.0
  %153 = vmatmul.mubr.f32.gmra.mrb[0].mxu0 %v59
  %v154 = vpop.f32.mrb[0].mxu0
  %v155 = vadd.f32 %v52, %v154
  %v156 = vpop.f32.mrb[0].mxu0
  %157 = vmatprep.mubr.f32.mxu0 0.0
  %158 = vmatmul.mubr.f32.gmra.mrb[0].mxu0 %v62
  %v159 = vpop.f32.mrb[0].mxu0
  %v160 = vadd.f32 %v52, %v159
  %v161 = vpop.f32.mrb[0].mxu0
  %162 = vmatprep.mubr.f32.mxu0 0.0
  %163 = vmatmul.mubr.f32.gmra.mrb[0].mxu0 %v65
  %v164 = vpop.f32.mrb[0].mxu0
  %v165 = vadd.f32 %v52, %v164
  %v166 = vpop.f32.mrb[0].mxu0
  %167 = vmatprep.mubr.f32.mxu0 0.0
  %168 = vmatmul.mubr.f32.gmra.mrb[0].mxu0 %v68
  %v169 = vpop.f32.mrb[0].mxu0
  %v170 = vadd.f32 %v52, %v169
  %v171 = vpop.f32.mrb[0].mxu0
  %172 = vmatprep.mubr.f32.mxu0 0.0
  %173 = vmatmul.mubr.f32.gmra.mrb[0].mxu0 %v71
  %v174 = vpop.f32.mrb[0].mxu0
  %v175 = vadd.f32 %v52, %v174
  %v176 = vpop.f32.mrb[0].mxu0
  %177 = vmatprep.mubr.f32.mxu0 0.0
  %178 = vmatmul.mubr.f32.gmra.mrb[0].mxu0 %v74
  %v179 = vpop.f32.mrb[0].mxu0
  %v180 = vadd.f32 %v52, %v179
  %v181 = vpop.f32.mrb[0].mxu0
  %182 = vmatprep.mubr.f32.mxu0 0.0
  %183 = vmatmul.mubr.f32.gmra.mrb[0].mxu0 %v77
  %v184 = vpop.f32.mrb[0].mxu0
  %v185 = vadd.f32 %v52, %v184
  %v186 = vpop.f32.mrb[0].mxu0
  %187 = vdwg.mxu0
  %v188 = vtanh.pop %v150
  %v189 = vtanh.pop %v155
  %v190 = vtanh.pop %v160
  %v191 = vtanh.pop %v165
  %v192 = vtanh.pop %v170
  %v193 = vtanh.pop %v175
  %v194 = vtanh.pop %v180
  %v195 = vtanh.pop %v185
  %v196 = vlaneseq
  %v197 = vand.u32 %v196, 127
  %vm198 = vcmp.lt.s32.totalorder %v197, 96
  %v199 = vld [vmem:[%s3] sm:$0xff]
  %v200 = vld [vmem:[%s3 + $0x8] sm:$0xff]
  %v201 = vld [vmem:[%s3 + $0x10] sm:$0xff]
  %v202 = vld [vmem:[%s3 + $0x18] sm:$0xff]
  %v203 = vld [vmem:[%s4] sm:$0xff]
  %v204 = vld [vmem:[%s4 + $0x8] sm:$0xff]
  %v205 = vld [vmem:[%s4 + $0x10] sm:$0xff]
  %v206 = vld [vmem:[%s4 + $0x18] sm:$0xff]
  %v207 = vld [vmem:[%s5] sm:$0x1]
  %v209 = vlaneseq
  %v210 = vshrl.u32 %v209, 7
  %v211 = vsub.s32 0, %v210
  %v212 = vrot.slane %v207, %v211
  %vm214 = vcmask 261120
  %v216 = vsel %vm214, %v188, 0
  %v219 = vsel %vm214, %v189, 0
  %v222 = vsel %vm214, %v190, 0
  %v225 = vsel %vm214, %v191, 0
  %v228 = vsel %vm214, %v192, 0
  %v231 = vsel %vm214, %v193, 0
  %v234 = vsel %vm214, %v194, 0
  %v237 = vsel %vm214, %v195, 0
  %239 = vmatprep.subr.mxu0 0.0
  %240 = vmatpush1.msra.mxu0 %v199
  %241 = vmatprep.subr.mxu0 0.0
  %242 = vmatpush1.msra.mxu0 %v200
  %243 = vmatprep.subr.mxu0 0.0
  %244 = vmatpush1.msra.mxu0 %v201
  %245 = vmatprep.subr.mxu0 0.0
  %246 = vmatpush1.msra.mxu0 %v202
  %247 = vmatprep.subr.mxu0 0.0
  %248 = vmatpush1.msra.mxu0 0.0
  %249 = vmatprep.subr.mxu0 0.0
  %250 = vmatpush1.msra.mxu0 0.0
  %251 = vmatprep.subr.mxu0 0.0
  %252 = vmatpush1.msra.mxu0 0.0
  %253 = vmatprep.subr.mxu0 0.0
  %254 = vmatpush1.msra.mxu0 0.0
  %255 = vmatprep.subr.mxu0 0.0
  %256 = vmatpush1.msra.mxu0 0.0
  %257 = vmatprep.subr.mxu0 0.0
  %258 = vmatpush1.msra.mxu0 0.0
  %259 = vmatprep.subr.mxu0 0.0
  %260 = vmatpush1.msra.mxu0 0.0
  %261 = vmatprep.subr.mxu0 0.0
  %262 = vmatpush1.msra.mxu0 0.0
  %263 = vmatprep.subr.mxu0 0.0
  %264 = vmatpush1.msra.mxu0 0.0
  %265 = vmatprep.subr.mxu0 0.0
  %266 = vmatpush1.msra.mxu0 0.0
  %267 = vmatprep.subr.mxu0 0.0
  %268 = vmatpush1.msra.mxu0 0.0
  %269 = vmatprep.subr.mxu0 0.0
  %270 = vmatpush1.msra.mxu0 0.0
  %271 = vmatprep.subr.mxu0 0.0
  %272 = vmatpush1.msra.mxu0 0.0
  %273 = vmatprep.subr.mxu0 0.0
  %274 = vmatpush1.msra.mxu0 0.0
  %275 = vmatprep.subr.mxu0 0.0
  %276 = vmatpush1.msra.mxu0 0.0
  %277 = vmatprep.subr.mxu0 0.0
  %278 = vmatpush1.msra.mxu0 0.0
  %279 = vmatprep.subr.mxu0 0.0
  %280 = vmatpush1.msra.mxu0 0.0
  %281 = vmatprep.subr.mxu0 0.0
  %282 = vmatpush1.msra.mxu0 0.0
  %283 = vmatprep.subr.mxu0 0.0
  %284 = vmatpush1.msra.mxu0 0.0
  %285 = vmatprep.subr.mxu0 0.0
  %286 = vmatpush1.msra.mxu0 0.0
  %287 = vmatprep.subr.mxu0 0.0
  %288 = vmatpush1.msra.mxu0 0.0
  %289 = vmatprep.subr.mxu0 0.0
  %290 = vmatpush1.msra.mxu0 0.0
  %291 = vmatprep.subr.mxu0 0.0
  %292 = vmatpush1.msra.mxu0 0.0
  %293 = vmatprep.subr.mxu0 0.0
  %294 = vmatpush1.msra.mxu0 0.0
  %295 = vmatprep.subr.mxu0 0.0
  %296 = vmatpush1.msra.mxu0 0.0
  %297 = vmatprep.subr.mxu0 0.0
  %298 = vmatpush1.msra.mxu0 0.0
  %299 = vmatprep.subr.mxu0 0.0
  %300 = vmatpush1.msra.mxu0 0.0
  %301 = vmatprep.subr.mxu0 0.0
  %302 = vmatpush1.msra.mxu0 0.0
  %303 = vmatprep.mubr.f32.mxu0 0.0
  %304 = vmatmul.mubr.f32.gmra.mrb[0].mxu0 %v216
  %v305 = vpop.f32.mrb[0].mxu0
  %v306 = vadd.f32 %v212, %v305
  %v307 = vpop.f32.mrb[0].mxu0
  %308 = vmatprep.mubr.f32.mxu0 0.0
  %309 = vmatmul.mubr.f32.gmra.mrb[0].mxu0 %v219
  %v310 = vpop.f32.mrb[0].mxu0
  %v311 = vadd.f32 %v212, %v310
  %v312 = vpop.f32.mrb[0].mxu0
  %313 = vmatprep.mubr.f32.mxu0 0.0
  %314 = vmatmul.mubr.f32.gmra.mrb[0].mxu0 %v222
  %v315 = vpop.f32.mrb[0].mxu0
  %v316 = vadd.f32 %v212, %v315
  %v317 = vpop.f32.mrb[0].mxu0
  %318 = vmatprep.mubr.f32.mxu0 0.0
  %319 = vmatmul.mubr.f32.gmra.mrb[0].mxu0 %v225
  %v320 = vpop.f32.mrb[0].mxu0
  %v321 = vadd.f32 %v212, %v320
  %v322 = vpop.f32.mrb[0].mxu0
  %323 = vmatprep.mubr.f32.mxu0 0.0
  %324 = vmatmul.mubr.f32.gmra.mrb[0].mxu0 %v228
  %v325 = vpop.f32.mrb[0].mxu0
  %v326 = vadd.f32 %v212, %v325
  %v327 = vpop.f32.mrb[0].mxu0
  %328 = vmatprep.mubr.f32.mxu0 0.0
  %329 = vmatmul.mubr.f32.gmra.mrb[0].mxu0 %v231
  %v330 = vpop.f32.mrb[0].mxu0
  %v331 = vadd.f32 %v212, %v330
  %v332 = vpop.f32.mrb[0].mxu0
  %333 = vmatprep.mubr.f32.mxu0 0.0
  %334 = vmatmul.mubr.f32.gmra.mrb[0].mxu0 %v234
  %v335 = vpop.f32.mrb[0].mxu0
  %v336 = vadd.f32 %v212, %v335
  %v337 = vpop.f32.mrb[0].mxu0
  %338 = vmatprep.mubr.f32.mxu0 0.0
  %339 = vmatmul.mubr.f32.gmra.mrb[0].mxu0 %v237
  %v340 = vpop.f32.mrb[0].mxu0
  %v341 = vadd.f32 %v212, %v340
  %v342 = vpop.f32.mrb[0].mxu0
  %343 = vdwg.mxu0
  %v345 = vsel %vm214, 0.0, 0
  %347 = vmatprep.subr.mxu0 0.0
  %348 = vmatpush1.msra.mxu0 %v203
  %349 = vmatprep.subr.mxu0 0.0
  %350 = vmatpush1.msra.mxu0 %v204
  %351 = vmatprep.subr.mxu0 0.0
  %352 = vmatpush1.msra.mxu0 %v205
  %353 = vmatprep.subr.mxu0 0.0
  %354 = vmatpush1.msra.mxu0 %v206
  %355 = vmatprep.subr.mxu0 0.0
  %356 = vmatpush1.msra.mxu0 0.0
  %357 = vmatprep.subr.mxu0 0.0
  %358 = vmatpush1.msra.mxu0 0.0
  %359 = vmatprep.subr.mxu0 0.0
  %360 = vmatpush1.msra.mxu0 0.0
  %361 = vmatprep.subr.mxu0 0.0
  %362 = vmatpush1.msra.mxu0 0.0
  %363 = vmatprep.subr.mxu0 0.0
  %364 = vmatpush1.msra.mxu0 0.0
  %365 = vmatprep.subr.mxu0 0.0
  %366 = vmatpush1.msra.mxu0 0.0
  %367 = vmatprep.subr.mxu0 0.0
  %368 = vmatpush1.msra.mxu0 0.0
  %369 = vmatprep.subr.mxu0 0.0
  %370 = vmatpush1.msra.mxu0 0.0
  %371 = vmatprep.subr.mxu0 0.0
  %372 = vmatpush1.msra.mxu0 0.0
  %373 = vmatprep.subr.mxu0 0.0
  %374 = vmatpush1.msra.mxu0 0.0
  %375 = vmatprep.subr.mxu0 0.0
  %376 = vmatpush1.msra.mxu0 0.0
  %377 = vmatprep.subr.mxu0 0.0
  %378 = vmatpush1.msra.mxu0 0.0
  %379 = vmatprep.subr.mxu0 0.0
  %380 = vmatpush1.msra.mxu0 0.0
  %381 = vmatprep.subr.mxu0 0.0
  %382 = vmatpush1.msra.mxu0 0.0
  %383 = vmatprep.subr.mxu0 0.0
  %384 = vmatpush1.msra.mxu0 0.0
  %385 = vmatprep.subr.mxu0 0.0
  %386 = vmatpush1.msra.mxu0 0.0
  %387 = vmatprep.subr.mxu0 0.0
  %388 = vmatpush1.msra.mxu0 0.0
  %389 = vmatprep.subr.mxu0 0.0
  %390 = vmatpush1.msra.mxu0 0.0
  %391 = vmatprep.subr.mxu0 0.0
  %392 = vmatpush1.msra.mxu0 0.0
  %393 = vmatprep.subr.mxu0 0.0
  %394 = vmatpush1.msra.mxu0 0.0
  %395 = vmatprep.subr.mxu0 0.0
  %396 = vmatpush1.msra.mxu0 0.0
  %397 = vmatprep.subr.mxu0 0.0
  %398 = vmatpush1.msra.mxu0 0.0
  %399 = vmatprep.subr.mxu0 0.0
  %400 = vmatpush1.msra.mxu0 0.0
  %401 = vmatprep.subr.mxu0 0.0
  %402 = vmatpush1.msra.mxu0 0.0
  %403 = vmatprep.subr.mxu0 0.0
  %404 = vmatpush1.msra.mxu0 0.0
  %405 = vmatprep.subr.mxu0 0.0
  %406 = vmatpush1.msra.mxu0 0.0
  %407 = vmatprep.subr.mxu0 0.0
  %408 = vmatpush1.msra.mxu0 0.0
  %409 = vmatprep.subr.mxu0 0.0
  %410 = vmatpush1.msra.mxu0 0.0
  %411 = vmatprep.mubr.f32.mxu0 0.0
  %412 = vmatmul.mubr.f32.gmra.mrb[0].mxu0 %v345
  %v413 = vpop.f32.mrb[0].mxu0
  %v414 = vadd.f32 0.0, %v413
  %v415 = vpop.f32.mrb[0].mxu0
  %416 = vdwg.mxu0
  %v417 = vadd.f32 %v306, %v414
  %v418 = vxor.u32 %v417, 2147483648
  %v419 = vmul.f32 %v418, 1.442695
  %v420 = vpow.pop %v419
  %v421 = vadd.f32 %v420, 1.0
  %v422 = vrcp.pop %v421
  %v423 = vmul.f32 1.0, %v422
  %v424 = vtanh.pop %v417
  %v425 = vsel %vm198, %v423, %v424
  %v426 = vmul.f32 %v425, 0.0
  %428 = vrot.lane.b32.xlu0 %v425, 32
  %v429 = vpop.permute.xlu0 %428
  %v431 = vmul.f32 %v425, %v429
  %433 = vrot.lane.b32.xlu0 %v431, 32
  %v434 = vpop.permute.xlu0 %433
  %v436 = vadd.f32 %v426, %v434
  %v437 = vtanh.pop %v436
  %439 = vrot.lane.b32.xlu0 %v437, 32
  %v440 = vpop.permute.xlu0 %439
  %v442 = vmul.f32 %v425, %v440
  %444 = vrot.lane.b32.xlu0 %v442, 64
  %v445 = vpop.permute.xlu0 %444
  %v446 = vsel %vm214, %v445, 0
  %448 = vmatprep.subr.mxu0 0.0
  %449 = vmatpush1.msra.mxu0 %v203
  %450 = vmatprep.subr.mxu0 0.0
  %451 = vmatpush1.msra.mxu0 %v204
  %452 = vmatprep.subr.mxu0 0.0
  %453 = vmatpush1.msra.mxu0 %v205
  %454 = vmatprep.subr.mxu0 0.0
  %455 = vmatpush1.msra.mxu0 %v206
  %456 = vmatprep.subr.mxu0 0.0
  %457 = vmatpush1.msra.mxu0 0.0
  %458 = vmatprep.subr.mxu0 0.0
  %459 = vmatpush1.msra.mxu0 0.0
  %460 = vmatprep.subr.mxu0 0.0
  %461 = vmatpush1.msra.mxu0 0.0
  %462 = vmatprep.subr.mxu0 0.0
  %463 = vmatpush1.msra.mxu0 0.0
  %464 = vmatprep.subr.mxu0 0.0
  %465 = vmatpush1.msra.mxu0 0.0
  %466 = vmatprep.subr.mxu0 0.0
  %467 = vmatpush1.msra.mxu0 0.0
  %468 = vmatprep.subr.mxu0 0.0
  %469 = vmatpush1.msra.mxu0 0.0
  %470 = vmatprep.subr.mxu0 0.0
  %471 = vmatpush1.msra.mxu0 0.0
  %472 = vmatprep.subr.mxu0 0.0
  %473 = vmatpush1.msra.mxu0 0.0
  %474 = vmatprep.subr.mxu0 0.0
  %475 = vmatpush1.msra.mxu0 0.0
  %476 = vmatprep.subr.mxu0 0.0
  %477 = vmatpush1.msra.mxu0 0.0
  %478 = vmatprep.subr.mxu0 0.0
  %479 = vmatpush1.msra.mxu0 0.0
  %480 = vmatprep.subr.mxu0 0.0
  %481 = vmatpush1.msra.mxu0 0.0
  %482 = vmatprep.subr.mxu0 0.0
  %483 = vmatpush1.msra.mxu0 0.0
  %484 = vmatprep.subr.mxu0 0.0
  %485 = vmatpush1.msra.mxu0 0.0
  %486 = vmatprep.subr.mxu0 0.0
  %487 = vmatpush1.msra.mxu0 0.0
  %488 = vmatprep.subr.mxu0 0.0
  %489 = vmatpush1.msra.mxu0 0.0
  %490 = vmatprep.subr.mxu0 0.0
  %491 = vmatpush1.msra.mxu0 0.0
  %492 = vmatprep.subr.mxu0 0.0
  %493 = vmatpush1.msra.mxu0 0.0
  %494 = vmatprep.subr.mxu0 0.0
  %495 = vmatpush1.msra.mxu0 0.0
  %496 = vmatprep.subr.mxu0 0.0
  %497 = vmatpush1.msra.mxu0 0.0
  %498 = vmatprep.subr.mxu0 0.0
  %499 = vmatpush1.msra.mxu0 0.0
  %500 = vmatprep.subr.mxu0 0.0
  %501 = vmatpush1.msra.mxu0 0.0
  %502 = vmatprep.subr.mxu0 0.0
  %503 = vmatpush1.msra.mxu0 0.0
  %504 = vmatprep.subr.mxu0 0.0
  %505 = vmatpush1.msra.mxu0 0.0
  %506 = vmatprep.subr.mxu0 0.0
  %507 = vmatpush1.msra.mxu0 0.0
  %508 = vmatprep.subr.mxu0 0.0
  %509 = vmatpush1.msra.mxu0 0.0
  %510 = vmatprep.subr.mxu0 0.0
  %511 = vmatpush1.msra.mxu0 0.0
  %512 = vmatprep.mubr.f32.mxu0 0.0
  %513 = vmatmul.mubr.f32.gmra.mrb[0].mxu0 %v446
  %v514 = vpop.f32.mrb[0].mxu0
  %v515 = vadd.f32 0.0, %v514
  %v516 = vpop.f32.mrb[0].mxu0
  %517 = vdwg.mxu0
  %v518 = vadd.f32 %v311, %v515
  %v519 = vxor.u32 %v518, 2147483648
  %v520 = vmul.f32 %v519, 1.442695
  %v521 = vpow.pop %v520
  %v522 = vadd.f32 %v521, 1.0
  %v523 = vrcp.pop %v522
  %v524 = vmul.f32 1.0, %v523
  %v525 = vtanh.pop %v518
  %v526 = vsel %vm198, %v524, %v525
  %v527 = vmul.f32 %v526, %v436
  %529 = vrot.lane.b32.xlu0 %v526, 32
  %v530 = vpop.permute.xlu0 %529
  %v532 = vmul.f32 %v526, %v530
  %534 = vrot.lane.b32.xlu0 %v532, 32
  %v535 = vpop.permute.xlu0 %534
  %v537 = vadd.f32 %v527, %v535
  %v538 = vtanh.pop %v537
  %540 = vrot.lane.b32.xlu0 %v538, 32
  %v541 = vpop.permute.xlu0 %540
  %v543 = vmul.f32 %v526, %v541
  %545 = vrot.lane.b32.xlu0 %v543, 64
  %v546 = vpop.permute.xlu0 %545
  %v547 = vsel %vm214, %v546, 0
  %549 = vmatprep.subr.mxu0 0.0
  %550 = vmatpush1.msra.mxu0 %v203
  %551 = vmatprep.subr.mxu0 0.0
  %552 = vmatpush1.msra.mxu0 %v204
  %553 = vmatprep.subr.mxu0 0.0
  %554 = vmatpush1.msra.mxu0 %v205
  %555 = vmatprep.subr.mxu0 0.0
  %556 = vmatpush1.msra.mxu0 %v206
  %557 = vmatprep.subr.mxu0 0.0
  %558 = vmatpush1.msra.mxu0 0.0
  %559 = vmatprep.subr.mxu0 0.0
  %560 = vmatpush1.msra.mxu0 0.0
  %561 = vmatprep.subr.mxu0 0.0
  %562 = vmatpush1.msra.mxu0 0.0
  %563 = vmatprep.subr.mxu0 0.0
  %564 = vmatpush1.msra.mxu0 0.0
  %565 = vmatprep.subr.mxu0 0.0
  %566 = vmatpush1.msra.mxu0 0.0
  %567 = vmatprep.subr.mxu0 0.0
  %568 = vmatpush1.msra.mxu0 0.0
  %569 = vmatprep.subr.mxu0 0.0
  %570 = vmatpush1.msra.mxu0 0.0
  %571 = vmatprep.subr.mxu0 0.0
  %572 = vmatpush1.msra.mxu0 0.0
  %573 = vmatprep.subr.mxu0 0.0
  %574 = vmatpush1.msra.mxu0 0.0
  %575 = vmatprep.subr.mxu0 0.0
  %576 = vmatpush1.msra.mxu0 0.0
  %577 = vmatprep.subr.mxu0 0.0
  %578 = vmatpush1.msra.mxu0 0.0
  %579 = vmatprep.subr.mxu0 0.0
  %580 = vmatpush1.msra.mxu0 0.0
  %581 = vmatprep.subr.mxu0 0.0
  %582 = vmatpush1.msra.mxu0 0.0
  %583 = vmatprep.subr.mxu0 0.0
  %584 = vmatpush1.msra.mxu0 0.0
  %585 = vmatprep.subr.mxu0 0.0
  %586 = vmatpush1.msra.mxu0 0.0
  %587 = vmatprep.subr.mxu0 0.0
  %588 = vmatpush1.msra.mxu0 0.0
  %589 = vmatprep.subr.mxu0 0.0
  %590 = vmatpush1.msra.mxu0 0.0
  %591 = vmatprep.subr.mxu0 0.0
  %592 = vmatpush1.msra.mxu0 0.0
  %593 = vmatprep.subr.mxu0 0.0
  %594 = vmatpush1.msra.mxu0 0.0
  %595 = vmatprep.subr.mxu0 0.0
  %596 = vmatpush1.msra.mxu0 0.0
  %597 = vmatprep.subr.mxu0 0.0
  %598 = vmatpush1.msra.mxu0 0.0
  %599 = vmatprep.subr.mxu0 0.0
  %600 = vmatpush1.msra.mxu0 0.0
  %601 = vmatprep.subr.mxu0 0.0
  %602 = vmatpush1.msra.mxu0 0.0
  %603 = vmatprep.subr.mxu0 0.0
  %604 = vmatpush1.msra.mxu0 0.0
  %605 = vmatprep.subr.mxu0 0.0
  %606 = vmatpush1.msra.mxu0 0.0
  %607 = vmatprep.subr.mxu0 0.0
  %608 = vmatpush1.msra.mxu0 0.0
  %609 = vmatprep.subr.mxu0 0.0
  %610 = vmatpush1.msra.mxu0 0.0
  %611 = vmatprep.subr.mxu0 0.0
  %612 = vmatpush1.msra.mxu0 0.0
  %613 = vmatprep.mubr.f32.mxu0 0.0
  %614 = vmatmul.mubr.f32.gmra.mrb[0].mxu0 %v547
  %v615 = vpop.f32.mrb[0].mxu0
  %v616 = vadd.f32 0.0, %v615
  %v617 = vpop.f32.mrb[0].mxu0
  %618 = vdwg.mxu0
  %v619 = vadd.f32 %v316, %v616
  %v620 = vxor.u32 %v619, 2147483648
  %v621 = vmul.f32 %v620, 1.442695
  %v622 = vpow.pop %v621
  %v623 = vadd.f32 %v622, 1.0
  %v624 = vrcp.pop %v623
  %v625 = vmul.f32 1.0, %v624
  %v626 = vtanh.pop %v619
  %v627 = vsel %vm198, %v625, %v626
  %v628 = vmul.f32 %v627, %v537
  %630 = vrot.lane.b32.xlu0 %v627, 32
  %v631 = vpop.permute.xlu0 %630
  %v633 = vmul.f32 %v627, %v631
  %635 = vrot.lane.b32.xlu0 %v633, 32
  %v636 = vpop.permute.xlu0 %635
  %v638 = vadd.f32 %v628, %v636
  %v639 = vtanh.pop %v638
  %641 = vrot.lane.b32.xlu0 %v639, 32
  %v642 = vpop.permute.xlu0 %641
  %v644 = vmul.f32 %v627, %v642
  %646 = vrot.lane.b32.xlu0 %v644, 64
  %v647 = vpop.permute.xlu0 %646
  %v648 = vsel %vm214, %v647, 0
  %650 = vmatprep.subr.mxu0 0.0
  %651 = vmatpush1.msra.mxu0 %v203
  %652 = vmatprep.subr.mxu0 0.0
  %653 = vmatpush1.msra.mxu0 %v204
  %654 = vmatprep.subr.mxu0 0.0
  %655 = vmatpush1.msra.mxu0 %v205
  %656 = vmatprep.subr.mxu0 0.0
  %657 = vmatpush1.msra.mxu0 %v206
  %658 = vmatprep.subr.mxu0 0.0
  %659 = vmatpush1.msra.mxu0 0.0
  %660 = vmatprep.subr.mxu0 0.0
  %661 = vmatpush1.msra.mxu0 0.0
  %662 = vmatprep.subr.mxu0 0.0
  %663 = vmatpush1.msra.mxu0 0.0
  %664 = vmatprep.subr.mxu0 0.0
  %665 = vmatpush1.msra.mxu0 0.0
  %666 = vmatprep.subr.mxu0 0.0
  %667 = vmatpush1.msra.mxu0 0.0
  %668 = vmatprep.subr.mxu0 0.0
  %669 = vmatpush1.msra.mxu0 0.0
  %670 = vmatprep.subr.mxu0 0.0
  %671 = vmatpush1.msra.mxu0 0.0
  %672 = vmatprep.subr.mxu0 0.0
  %673 = vmatpush1.msra.mxu0 0.0
  %674 = vmatprep.subr.mxu0 0.0
  %675 = vmatpush1.msra.mxu0 0.0
  %676 = vmatprep.subr.mxu0 0.0
  %677 = vmatpush1.msra.mxu0 0.0
  %678 = vmatprep.subr.mxu0 0.0
  %679 = vmatpush1.msra.mxu0 0.0
  %680 = vmatprep.subr.mxu0 0.0
  %681 = vmatpush1.msra.mxu0 0.0
  %682 = vmatprep.subr.mxu0 0.0
  %683 = vmatpush1.msra.mxu0 0.0
  %684 = vmatprep.subr.mxu0 0.0
  %685 = vmatpush1.msra.mxu0 0.0
  %686 = vmatprep.subr.mxu0 0.0
  %687 = vmatpush1.msra.mxu0 0.0
  %688 = vmatprep.subr.mxu0 0.0
  %689 = vmatpush1.msra.mxu0 0.0
  %690 = vmatprep.subr.mxu0 0.0
  %691 = vmatpush1.msra.mxu0 0.0
  %692 = vmatprep.subr.mxu0 0.0
  %693 = vmatpush1.msra.mxu0 0.0
  %694 = vmatprep.subr.mxu0 0.0
  %695 = vmatpush1.msra.mxu0 0.0
  %696 = vmatprep.subr.mxu0 0.0
  %697 = vmatpush1.msra.mxu0 0.0
  %698 = vmatprep.subr.mxu0 0.0
  %699 = vmatpush1.msra.mxu0 0.0
  %700 = vmatprep.subr.mxu0 0.0
  %701 = vmatpush1.msra.mxu0 0.0
  %702 = vmatprep.subr.mxu0 0.0
  %703 = vmatpush1.msra.mxu0 0.0
  %704 = vmatprep.subr.mxu0 0.0
  %705 = vmatpush1.msra.mxu0 0.0
  %706 = vmatprep.subr.mxu0 0.0
  %707 = vmatpush1.msra.mxu0 0.0
  %708 = vmatprep.subr.mxu0 0.0
  %709 = vmatpush1.msra.mxu0 0.0
  %710 = vmatprep.subr.mxu0 0.0
  %711 = vmatpush1.msra.mxu0 0.0
  %712 = vmatprep.subr.mxu0 0.0
  %713 = vmatpush1.msra.mxu0 0.0
  %714 = vmatprep.mubr.f32.mxu0 0.0
  %715 = vmatmul.mubr.f32.gmra.mrb[0].mxu0 %v648
  %v716 = vpop.f32.mrb[0].mxu0
  %v717 = vadd.f32 0.0, %v716
  %v718 = vpop.f32.mrb[0].mxu0
  %719 = vdwg.mxu0
  %v720 = vadd.f32 %v321, %v717
  %v721 = vxor.u32 %v720, 2147483648
  %v722 = vmul.f32 %v721, 1.442695
  %v723 = vpow.pop %v722
  %v724 = vadd.f32 %v723, 1.0
  %v725 = vrcp.pop %v724
  %v726 = vmul.f32 1.0, %v725
  %v727 = vtanh.pop %v720
  %v728 = vsel %vm198, %v726, %v727
  %v729 = vmul.f32 %v728, %v638
  %731 = vrot.lane.b32.xlu0 %v728, 32
  %v732 = vpop.permute.xlu0 %731
  %v734 = vmul.f32 %v728, %v732
  %736 = vrot.lane.b32.xlu0 %v734, 32
  %v737 = vpop.permute.xlu0 %736
  %v739 = vadd.f32 %v729, %v737
  %v740 = vtanh.pop %v739
  %742 = vrot.lane.b32.xlu0 %v740, 32
  %v743 = vpop.permute.xlu0 %742
  %v745 = vmul.f32 %v728, %v743
  %747 = vrot.lane.b32.xlu0 %v745, 64
  %v748 = vpop.permute.xlu0 %747
  %v749 = vsel %vm214, %v748, 0
  %751 = vmatprep.subr.mxu0 0.0
  %752 = vmatpush1.msra.mxu0 %v203
  %753 = vmatprep.subr.mxu0 0.0
  %754 = vmatpush1.msra.mxu0 %v204
  %755 = vmatprep.subr.mxu0 0.0
  %756 = vmatpush1.msra.mxu0 %v205
  %757 = vmatprep.subr.mxu0 0.0
  %758 = vmatpush1.msra.mxu0 %v206
  %759 = vmatprep.subr.mxu0 0.0
  %760 = vmatpush1.msra.mxu0 0.0
  %761 = vmatprep.subr.mxu0 0.0
  %762 = vmatpush1.msra.mxu0 0.0
  %763 = vmatprep.subr.mxu0 0.0
  %764 = vmatpush1.msra.mxu0 0.0
  %765 = vmatprep.subr.mxu0 0.0
  %766 = vmatpush1.msra.mxu0 0.0
  %767 = vmatprep.subr.mxu0 0.0
  %768 = vmatpush1.msra.mxu0 0.0
  %769 = vmatprep.subr.mxu0 0.0
  %770 = vmatpush1.msra.mxu0 0.0
  %771 = vmatprep.subr.mxu0 0.0
  %772 = vmatpush1.msra.mxu0 0.0
  %773 = vmatprep.subr.mxu0 0.0
  %774 = vmatpush1.msra.mxu0 0.0
  %775 = vmatprep.subr.mxu0 0.0
  %776 = vmatpush1.msra.mxu0 0.0
  %777 = vmatprep.subr.mxu0 0.0
  %778 = vmatpush1.msra.mxu0 0.0
  %779 = vmatprep.subr.mxu0 0.0
  %780 = vmatpush1.msra.mxu0 0.0
  %781 = vmatprep.subr.mxu0 0.0
  %782 = vmatpush1.msra.mxu0 0.0
  %783 = vmatprep.subr.mxu0 0.0
  %784 = vmatpush1.msra.mxu0 0.0
  %785 = vmatprep.subr.mxu0 0.0
  %786 = vmatpush1.msra.mxu0 0.0
  %787 = vmatprep.subr.mxu0 0.0
  %788 = vmatpush1.msra.mxu0 0.0
  %789 = vmatprep.subr.mxu0 0.0
  %790 = vmatpush1.msra.mxu0 0.0
  %791 = vmatprep.subr.mxu0 0.0
  %792 = vmatpush1.msra.mxu0 0.0
  %793 = vmatprep.subr.mxu0 0.0
  %794 = vmatpush1.msra.mxu0 0.0
  %795 = vmatprep.subr.mxu0 0.0
  %796 = vmatpush1.msra.mxu0 0.0
  %797 = vmatprep.subr.mxu0 0.0
  %798 = vmatpush1.msra.mxu0 0.0
  %799 = vmatprep.subr.mxu0 0.0
  %800 = vmatpush1.msra.mxu0 0.0
  %801 = vmatprep.subr.mxu0 0.0
  %802 = vmatpush1.msra.mxu0 0.0
  %803 = vmatprep.subr.mxu0 0.0
  %804 = vmatpush1.msra.mxu0 0.0
  %805 = vmatprep.subr.mxu0 0.0
  %806 = vmatpush1.msra.mxu0 0.0
  %807 = vmatprep.subr.mxu0 0.0
  %808 = vmatpush1.msra.mxu0 0.0
  %809 = vmatprep.subr.mxu0 0.0
  %810 = vmatpush1.msra.mxu0 0.0
  %811 = vmatprep.subr.mxu0 0.0
  %812 = vmatpush1.msra.mxu0 0.0
  %813 = vmatprep.subr.mxu0 0.0
  %814 = vmatpush1.msra.mxu0 0.0
  %815 = vmatprep.mubr.f32.mxu0 0.0
  %816 = vmatmul.mubr.f32.gmra.mrb[0].mxu0 %v749
  %v817 = vpop.f32.mrb[0].mxu0
  %v818 = vadd.f32 0.0, %v817
  %v819 = vpop.f32.mrb[0].mxu0
  %820 = vdwg.mxu0
  %v821 = vadd.f32 %v326, %v818
  %v822 = vxor.u32 %v821, 2147483648
  %v823 = vmul.f32 %v822, 1.442695
  %v824 = vpow.pop %v823
  %v825 = vadd.f32 %v824, 1.0
  %v826 = vrcp.pop %v825
  %v827 = vmul.f32 1.0, %v826
  %v828 = vtanh.pop %v821
  %v829 = vsel %vm198, %v827, %v828
  %v830 = vmul.f32 %v829, %v739
  %832 = vrot.lane.b32.xlu0 %v829, 32
  %v833 = vpop.permute.xlu0 %832
  %v835 = vmul.f32 %v829, %v833
  %837 = vrot.lane.b32.xlu0 %v835, 32
  %v838 = vpop.permute.xlu0 %837
  %v840 = vadd.f32 %v830, %v838
  %v841 = vtanh.pop %v840
  %843 = vrot.lane.b32.xlu0 %v841, 32
  %v844 = vpop.permute.xlu0 %843
  %v846 = vmul.f32 %v829, %v844
  %848 = vrot.lane.b32.xlu0 %v846, 64
  %v849 = vpop.permute.xlu0 %848
  %v850 = vsel %vm214, %v849, 0
  %852 = vmatprep.subr.mxu0 0.0
  %853 = vmatpush1.msra.mxu0 %v203
  %854 = vmatprep.subr.mxu0 0.0
  %855 = vmatpush1.msra.mxu0 %v204
  %856 = vmatprep.subr.mxu0 0.0
  %857 = vmatpush1.msra.mxu0 %v205
  %858 = vmatprep.subr.mxu0 0.0
  %859 = vmatpush1.msra.mxu0 %v206
  %860 = vmatprep.subr.mxu0 0.0
  %861 = vmatpush1.msra.mxu0 0.0
  %862 = vmatprep.subr.mxu0 0.0
  %863 = vmatpush1.msra.mxu0 0.0
  %864 = vmatprep.subr.mxu0 0.0
  %865 = vmatpush1.msra.mxu0 0.0
  %866 = vmatprep.subr.mxu0 0.0
  %867 = vmatpush1.msra.mxu0 0.0
  %868 = vmatprep.subr.mxu0 0.0
  %869 = vmatpush1.msra.mxu0 0.0
  %870 = vmatprep.subr.mxu0 0.0
  %871 = vmatpush1.msra.mxu0 0.0
  %872 = vmatprep.subr.mxu0 0.0
  %873 = vmatpush1.msra.mxu0 0.0
  %874 = vmatprep.subr.mxu0 0.0
  %875 = vmatpush1.msra.mxu0 0.0
  %876 = vmatprep.subr.mxu0 0.0
  %877 = vmatpush1.msra.mxu0 0.0
  %878 = vmatprep.subr.mxu0 0.0
  %879 = vmatpush1.msra.mxu0 0.0
  %880 = vmatprep.subr.mxu0 0.0
  %881 = vmatpush1.msra.mxu0 0.0
  %882 = vmatprep.subr.mxu0 0.0
  %883 = vmatpush1.msra.mxu0 0.0
  %884 = vmatprep.subr.mxu0 0.0
  %885 = vmatpush1.msra.mxu0 0.0
  %886 = vmatprep.subr.mxu0 0.0
  %887 = vmatpush1.msra.mxu0 0.0
  %888 = vmatprep.subr.mxu0 0.0
  %889 = vmatpush1.msra.mxu0 0.0
  %890 = vmatprep.subr.mxu0 0.0
  %891 = vmatpush1.msra.mxu0 0.0
  %892 = vmatprep.subr.mxu0 0.0
  %893 = vmatpush1.msra.mxu0 0.0
  %894 = vmatprep.subr.mxu0 0.0
  %895 = vmatpush1.msra.mxu0 0.0
  %896 = vmatprep.subr.mxu0 0.0
  %897 = vmatpush1.msra.mxu0 0.0
  %898 = vmatprep.subr.mxu0 0.0
  %899 = vmatpush1.msra.mxu0 0.0
  %900 = vmatprep.subr.mxu0 0.0
  %901 = vmatpush1.msra.mxu0 0.0
  %902 = vmatprep.subr.mxu0 0.0
  %903 = vmatpush1.msra.mxu0 0.0
  %904 = vmatprep.subr.mxu0 0.0
  %905 = vmatpush1.msra.mxu0 0.0
  %906 = vmatprep.subr.mxu0 0.0
  %907 = vmatpush1.msra.mxu0 0.0
  %908 = vmatprep.subr.mxu0 0.0
  %909 = vmatpush1.msra.mxu0 0.0
  %910 = vmatprep.subr.mxu0 0.0
  %911 = vmatpush1.msra.mxu0 0.0
  %912 = vmatprep.subr.mxu0 0.0
  %913 = vmatpush1.msra.mxu0 0.0
  %914 = vmatprep.subr.mxu0 0.0
  %915 = vmatpush1.msra.mxu0 0.0
  %916 = vmatprep.mubr.f32.mxu0 0.0
  %917 = vmatmul.mubr.f32.gmra.mrb[0].mxu0 %v850
  %v918 = vpop.f32.mrb[0].mxu0
  %v919 = vadd.f32 0.0, %v918
  %v920 = vpop.f32.mrb[0].mxu0
  %921 = vdwg.mxu0
  %v922 = vadd.f32 %v331, %v919
  %v923 = vxor.u32 %v922, 2147483648
  %v924 = vmul.f32 %v923, 1.442695
  %v925 = vpow.pop %v924
  %v926 = vadd.f32 %v925, 1.0
  %v927 = vrcp.pop %v926
  %v928 = vmul.f32 1.0, %v927
  %v929 = vtanh.pop %v922
  %v930 = vsel %vm198, %v928, %v929
  %v931 = vmul.f32 %v930, %v840
  %933 = vrot.lane.b32.xlu0 %v930, 32
  %v934 = vpop.permute.xlu0 %933
  %v936 = vmul.f32 %v930, %v934
  %938 = vrot.lane.b32.xlu0 %v936, 32
  %v939 = vpop.permute.xlu0 %938
  %v941 = vadd.f32 %v931, %v939
  %v942 = vtanh.pop %v941
  %944 = vrot.lane.b32.xlu0 %v942, 32
  %v945 = vpop.permute.xlu0 %944
  %v947 = vmul.f32 %v930, %v945
  %949 = vrot.lane.b32.xlu0 %v947, 64
  %v950 = vpop.permute.xlu0 %949
  %v951 = vsel %vm214, %v950, 0
  %953 = vmatprep.subr.mxu0 0.0
  %954 = vmatpush1.msra.mxu0 %v203
  %955 = vmatprep.subr.mxu0 0.0
  %956 = vmatpush1.msra.mxu0 %v204
  %957 = vmatprep.subr.mxu0 0.0
  %958 = vmatpush1.msra.mxu0 %v205
  %959 = vmatprep.subr.mxu0 0.0
  %960 = vmatpush1.msra.mxu0 %v206
  %961 = vmatprep.subr.mxu0 0.0
  %962 = vmatpush1.msra.mxu0 0.0
  %963 = vmatprep.subr.mxu0 0.0
  %964 = vmatpush1.msra.mxu0 0.0
  %965 = vmatprep.subr.mxu0 0.0
  %966 = vmatpush1.msra.mxu0 0.0
  %967 = vmatprep.subr.mxu0 0.0
  %968 = vmatpush1.msra.mxu0 0.0
  %969 = vmatprep.subr.mxu0 0.0
  %970 = vmatpush1.msra.mxu0 0.0
  %971 = vmatprep.subr.mxu0 0.0
  %972 = vmatpush1.msra.mxu0 0.0
  %973 = vmatprep.subr.mxu0 0.0
  %974 = vmatpush1.msra.mxu0 0.0
  %975 = vmatprep.subr.mxu0 0.0
  %976 = vmatpush1.msra.mxu0 0.0
  %977 = vmatprep.subr.mxu0 0.0
  %978 = vmatpush1.msra.mxu0 0.0
  %979 = vmatprep.subr.mxu0 0.0
  %980 = vmatpush1.msra.mxu0 0.0
  %981 = vmatprep.subr.mxu0 0.0
  %982 = vmatpush1.msra.mxu0 0.0
  %983 = vmatprep.subr.mxu0 0.0
  %984 = vmatpush1.msra.mxu0 0.0
  %985 = vmatprep.subr.mxu0 0.0
  %986 = vmatpush1.msra.mxu0 0.0
  %987 = vmatprep.subr.mxu0 0.0
  %988 = vmatpush1.msra.mxu0 0.0
  %989 = vmatprep.subr.mxu0 0.0
  %990 = vmatpush1.msra.mxu0 0.0
  %991 = vmatprep.subr.mxu0 0.0
  %992 = vmatpush1.msra.mxu0 0.0
  %993 = vmatprep.subr.mxu0 0.0
  %994 = vmatpush1.msra.mxu0 0.0
  %995 = vmatprep.subr.mxu0 0.0
  %996 = vmatpush1.msra.mxu0 0.0
  %997 = vmatprep.subr.mxu0 0.0
  %998 = vmatpush1.msra.mxu0 0.0
  %999 = vmatprep.subr.mxu0 0.0
  %1000 = vmatpush1.msra.mxu0 0.0
  %1001 = vmatprep.subr.mxu0 0.0
  %1002 = vmatpush1.msra.mxu0 0.0
  %1003 = vmatprep.subr.mxu0 0.0
  %1004 = vmatpush1.msra.mxu0 0.0
  %1005 = vmatprep.subr.mxu0 0.0
  %1006 = vmatpush1.msra.mxu0 0.0
  %1007 = vmatprep.subr.mxu0 0.0
  %1008 = vmatpush1.msra.mxu0 0.0
  %1009 = vmatprep.subr.mxu0 0.0
  %1010 = vmatpush1.msra.mxu0 0.0
  %1011 = vmatprep.subr.mxu0 0.0
  %1012 = vmatpush1.msra.mxu0 0.0
  %1013 = vmatprep.subr.mxu0 0.0
  %1014 = vmatpush1.msra.mxu0 0.0
  %1015 = vmatprep.subr.mxu0 0.0
  %1016 = vmatpush1.msra.mxu0 0.0
  %1017 = vmatprep.mubr.f32.mxu0 0.0
  %1018 = vmatmul.mubr.f32.gmra.mrb[0].mxu0 %v951
  %v1019 = vpop.f32.mrb[0].mxu0
  %v1020 = vadd.f32 0.0, %v1019
  %v1021 = vpop.f32.mrb[0].mxu0
  %1022 = vdwg.mxu0
  %v1023 = vadd.f32 %v336, %v1020
  %v1024 = vxor.u32 %v1023, 2147483648
  %v1025 = vmul.f32 %v1024, 1.442695
  %v1026 = vpow.pop %v1025
  %v1027 = vadd.f32 %v1026, 1.0
  %v1028 = vrcp.pop %v1027
  %v1029 = vmul.f32 1.0, %v1028
  %v1030 = vtanh.pop %v1023
  %v1031 = vsel %vm198, %v1029, %v1030
  %v1032 = vmul.f32 %v1031, %v941
  %1034 = vrot.lane.b32.xlu0 %v1031, 32
  %v1035 = vpop.permute.xlu0 %1034
  %v1037 = vmul.f32 %v1031, %v1035
  %1039 = vrot.lane.b32.xlu0 %v1037, 32
  %v1040 = vpop.permute.xlu0 %1039
  %v1042 = vadd.f32 %v1032, %v1040
  %v1043 = vtanh.pop %v1042
  %1045 = vrot.lane.b32.xlu0 %v1043, 32
  %v1046 = vpop.permute.xlu0 %1045
  %v1048 = vmul.f32 %v1031, %v1046
  %1050 = vrot.lane.b32.xlu0 %v1048, 64
  %v1051 = vpop.permute.xlu0 %1050
  %v1052 = vsel %vm214, %v1051, 0
  %1054 = vmatprep.subr.mxu0 0.0
  %1055 = vmatpush1.msra.mxu0 %v203
  %1056 = vmatprep.subr.mxu0 0.0
  %1057 = vmatpush1.msra.mxu0 %v204
  %1058 = vmatprep.subr.mxu0 0.0
  %1059 = vmatpush1.msra.mxu0 %v205
  %1060 = vmatprep.subr.mxu0 0.0
  %1061 = vmatpush1.msra.mxu0 %v206
  %1062 = vmatprep.subr.mxu0 0.0
  %1063 = vmatpush1.msra.mxu0 0.0
  %1064 = vmatprep.subr.mxu0 0.0
  %1065 = vmatpush1.msra.mxu0 0.0
  %1066 = vmatprep.subr.mxu0 0.0
  %1067 = vmatpush1.msra.mxu0 0.0
  %1068 = vmatprep.subr.mxu0 0.0
  %1069 = vmatpush1.msra.mxu0 0.0
  %1070 = vmatprep.subr.mxu0 0.0
  %1071 = vmatpush1.msra.mxu0 0.0
  %1072 = vmatprep.subr.mxu0 0.0
  %1073 = vmatpush1.msra.mxu0 0.0
  %1074 = vmatprep.subr.mxu0 0.0
  %1075 = vmatpush1.msra.mxu0 0.0
  %1076 = vmatprep.subr.mxu0 0.0
  %1077 = vmatpush1.msra.mxu0 0.0
  %1078 = vmatprep.subr.mxu0 0.0
  %1079 = vmatpush1.msra.mxu0 0.0
  %1080 = vmatprep.subr.mxu0 0.0
  %1081 = vmatpush1.msra.mxu0 0.0
  %1082 = vmatprep.subr.mxu0 0.0
  %1083 = vmatpush1.msra.mxu0 0.0
  %1084 = vmatprep.subr.mxu0 0.0
  %1085 = vmatpush1.msra.mxu0 0.0
  %1086 = vmatprep.subr.mxu0 0.0
  %1087 = vmatpush1.msra.mxu0 0.0
  %1088 = vmatprep.subr.mxu0 0.0
  %1089 = vmatpush1.msra.mxu0 0.0
  %1090 = vmatprep.subr.mxu0 0.0
  %1091 = vmatpush1.msra.mxu0 0.0
  %1092 = vmatprep.subr.mxu0 0.0
  %1093 = vmatpush1.msra.mxu0 0.0
  %1094 = vmatprep.subr.mxu0 0.0
  %1095 = vmatpush1.msra.mxu0 0.0
  %1096 = vmatprep.subr.mxu0 0.0
  %1097 = vmatpush1.msra.mxu0 0.0
  %1098 = vmatprep.subr.mxu0 0.0
  %1099 = vmatpush1.msra.mxu0 0.0
  %1100 = vmatprep.subr.mxu0 0.0
  %1101 = vmatpush1.msra.mxu0 0.0
  %1102 = vmatprep.subr.mxu0 0.0
  %1103 = vmatpush1.msra.mxu0 0.0
  %1104 = vmatprep.subr.mxu0 0.0
  %1105 = vmatpush1.msra.mxu0 0.0
  %1106 = vmatprep.subr.mxu0 0.0
  %1107 = vmatpush1.msra.mxu0 0.0
  %1108 = vmatprep.subr.mxu0 0.0
  %1109 = vmatpush1.msra.mxu0 0.0
  %1110 = vmatprep.subr.mxu0 0.0
  %1111 = vmatpush1.msra.mxu0 0.0
  %1112 = vmatprep.subr.mxu0 0.0
  %1113 = vmatpush1.msra.mxu0 0.0
  %1114 = vmatprep.subr.mxu0 0.0
  %1115 = vmatpush1.msra.mxu0 0.0
  %1116 = vmatprep.subr.mxu0 0.0
  %1117 = vmatpush1.msra.mxu0 0.0
  %1118 = vmatprep.mubr.f32.mxu0 0.0
  %1119 = vmatmul.mubr.f32.gmra.mrb[0].mxu0 %v1052
  %v1120 = vpop.f32.mrb[0].mxu0
  %v1121 = vadd.f32 0.0, %v1120
  %v1122 = vpop.f32.mrb[0].mxu0
  %1123 = vdwg.mxu0
  %v1124 = vadd.f32 %v341, %v1121
  %v1125 = vxor.u32 %v1124, 2147483648
  %v1126 = vmul.f32 %v1125, 1.442695
  %v1127 = vpow.pop %v1126
  %v1128 = vadd.f32 %v1127, 1.0
  %v1129 = vrcp.pop %v1128
  %v1130 = vmul.f32 1.0, %v1129
  %v1131 = vtanh.pop %v1124
  %v1132 = vsel %vm198, %v1130, %v1131
  %v1133 = vmul.f32 %v1132, %v1042
  %1135 = vrot.lane.b32.xlu0 %v1132, 32
  %v1136 = vpop.permute.xlu0 %1135
  %v1138 = vmul.f32 %v1132, %v1136
  %1140 = vrot.lane.b32.xlu0 %v1138, 32
  %v1141 = vpop.permute.xlu0 %1140
  %v1143 = vadd.f32 %v1133, %v1141
  %v1144 = vtanh.pop %v1143
  %1146 = vrot.lane.b32.xlu0 %v1144, 32
  %v1147 = vpop.permute.xlu0 %1146
  %v1149 = vmul.f32 %v1132, %v1147
  %v1150 = vld [vmem:[%s6] sm:$0xff]
  %v1151 = vld [vmem:[%s6 + $0x8] sm:$0xff]
  %v1152 = vld [vmem:[%s6 + $0x10] sm:$0xff]
  %v1153 = vld [vmem:[%s6 + $0x18] sm:$0xff]
  %v1154 = vld [vmem:[%s7] sm:$0xff]
  %v1155 = vld [vmem:[%s7 + $0x8] sm:$0xff]
  %v1156 = vld [vmem:[%s7 + $0x10] sm:$0xff]
  %v1157 = vld [vmem:[%s7 + $0x18] sm:$0xff]
  %v1158 = vld [vmem:[%s8] sm:$0x1]
  %v1160 = vlaneseq
  %v1161 = vshrl.u32 %v1160, 7
  %v1162 = vsub.s32 0, %v1161
  %v1163 = vrot.slane %v1158, %v1162
  %1166 = vrot.lane.b32.xlu0 %v1149, 64
  %v1167 = vpop.permute.xlu0 %1166
  %v1168 = vsel %vm214, %v1167, 0
  %1170 = vmatprep.subr.mxu0 0.0
  %1171 = vmatpush1.msra.mxu0 %v1150
  %1172 = vmatprep.subr.mxu0 0.0
  %1173 = vmatpush1.msra.mxu0 %v1151
  %1174 = vmatprep.subr.mxu0 0.0
  %1175 = vmatpush1.msra.mxu0 %v1152
  %1176 = vmatprep.subr.mxu0 0.0
  %1177 = vmatpush1.msra.mxu0 %v1153
  %1178 = vmatprep.subr.mxu0 0.0
  %1179 = vmatpush1.msra.mxu0 0.0
  %1180 = vmatprep.subr.mxu0 0.0
  %1181 = vmatpush1.msra.mxu0 0.0
  %1182 = vmatprep.subr.mxu0 0.0
  %1183 = vmatpush1.msra.mxu0 0.0
  %1184 = vmatprep.subr.mxu0 0.0
  %1185 = vmatpush1.msra.mxu0 0.0
  %1186 = vmatprep.subr.mxu0 0.0
  %1187 = vmatpush1.msra.mxu0 0.0
  %1188 = vmatprep.subr.mxu0 0.0
  %1189 = vmatpush1.msra.mxu0 0.0
  %1190 = vmatprep.subr.mxu0 0.0
  %1191 = vmatpush1.msra.mxu0 0.0
  %1192 = vmatprep.subr.mxu0 0.0
  %1193 = vmatpush1.msra.mxu0 0.0
  %1194 = vmatprep.subr.mxu0 0.0
  %1195 = vmatpush1.msra.mxu0 0.0
  %1196 = vmatprep.subr.mxu0 0.0
  %1197 = vmatpush1.msra.mxu0 0.0
  %1198 = vmatprep.subr.mxu0 0.0
  %1199 = vmatpush1.msra.mxu0 0.0
  %1200 = vmatprep.subr.mxu0 0.0
  %1201 = vmatpush1.msra.mxu0 0.0
  %1202 = vmatprep.subr.mxu0 0.0
  %1203 = vmatpush1.msra.mxu0 0.0
  %1204 = vmatprep.subr.mxu0 0.0
  %1205 = vmatpush1.msra.mxu0 0.0
  %1206 = vmatprep.subr.mxu0 0.0
  %1207 = vmatpush1.msra.mxu0 0.0
  %1208 = vmatprep.subr.mxu0 0.0
  %1209 = vmatpush1.msra.mxu0 0.0
  %1210 = vmatprep.subr.mxu0 0.0
  %1211 = vmatpush1.msra.mxu0 0.0
  %1212 = vmatprep.subr.mxu0 0.0
  %1213 = vmatpush1.msra.mxu0 0.0
  %1214 = vmatprep.subr.mxu0 0.0
  %1215 = vmatpush1.msra.mxu0 0.0
  %1216 = vmatprep.subr.mxu0 0.0
  %1217 = vmatpush1.msra.mxu0 0.0
  %1218 = vmatprep.subr.mxu0 0.0
  %1219 = vmatpush1.msra.mxu0 0.0
  %1220 = vmatprep.subr.mxu0 0.0
  %1221 = vmatpush1.msra.mxu0 0.0
  %1222 = vmatprep.subr.mxu0 0.0
  %1223 = vmatpush1.msra.mxu0 0.0
  %1224 = vmatprep.subr.mxu0 0.0
  %1225 = vmatpush1.msra.mxu0 0.0
  %1226 = vmatprep.subr.mxu0 0.0
  %1227 = vmatpush1.msra.mxu0 0.0
  %1228 = vmatprep.subr.mxu0 0.0
  %1229 = vmatpush1.msra.mxu0 0.0
  %1230 = vmatprep.subr.mxu0 0.0
  %1231 = vmatpush1.msra.mxu0 0.0
  %1232 = vmatprep.subr.mxu0 0.0
  %1233 = vmatpush1.msra.mxu0 0.0
  %1234 = vmatprep.mubr.f32.mxu0 0.0
  %1235 = vmatmul.mubr.f32.gmra.mrb[0].mxu0 %v446
  %v1236 = vpop.f32.mrb[0].mxu0
  %v1237 = vadd.f32 %v1163, %v1236
  %v1238 = vpop.f32.mrb[0].mxu0
  %1239 = vmatprep.mubr.f32.mxu0 0.0
  %1240 = vmatmul.mubr.f32.gmra.mrb[0].mxu0 %v547
  %v1241 = vpop.f32.mrb[0].mxu0
  %v1242 = vadd.f32 %v1163, %v1241
  %v1243 = vpop.f32.mrb[0].mxu0
  %1244 = vmatprep.mubr.f32.mxu0 0.0
  %1245 = vmatmul.mubr.f32.gmra.mrb[0].mxu0 %v648
  %v1246 = vpop.f32.mrb[0].mxu0
  %v1247 = vadd.f32 %v1163, %v1246
  %v1248 = vpop.f32.mrb[0].mxu0
  %1249 = vmatprep.mubr.f32.mxu0 0.0
  %1250 = vmatmul.mubr.f32.gmra.mrb[0].mxu0 %v749
  %v1251 = vpop.f32.mrb[0].mxu0
  %v1252 = vadd.f32 %v1163, %v1251
  %v1253 = vpop.f32.mrb[0].mxu0
  %1254 = vmatprep.mubr.f32.mxu0 0.0
  %1255 = vmatmul.mubr.f32.gmra.mrb[0].mxu0 %v850
  %v1256 = vpop.f32.mrb[0].mxu0
  %v1257 = vadd.f32 %v1163, %v1256
  %v1258 = vpop.f32.mrb[0].mxu0
  %1259 = vmatprep.mubr.f32.mxu0 0.0
  %1260 = vmatmul.mubr.f32.gmra.mrb[0].mxu0 %v951
  %v1261 = vpop.f32.mrb[0].mxu0
  %v1262 = vadd.f32 %v1163, %v1261
  %v1263 = vpop.f32.mrb[0].mxu0
  %1264 = vmatprep.mubr.f32.mxu0 0.0
  %1265 = vmatmul.mubr.f32.gmra.mrb[0].mxu0 %v1052
  %v1266 = vpop.f32.mrb[0].mxu0
  %v1267 = vadd.f32 %v1163, %v1266
  %v1268 = vpop.f32.mrb[0].mxu0
  %1269 = vmatprep.mubr.f32.mxu0 0.0
  %1270 = vmatmul.mubr.f32.gmra.mrb[0].mxu0 %v1168
  %v1271 = vpop.f32.mrb[0].mxu0
  %v1272 = vadd.f32 %v1163, %v1271
  %v1273 = vpop.f32.mrb[0].mxu0
  %1274 = vdwg.mxu0
  %1275 = vmatprep.subr.mxu0 0.0
  %1276 = vmatpush1.msra.mxu0 %v1154
  %1277 = vmatprep.subr.mxu0 0.0
  %1278 = vmatpush1.msra.mxu0 %v1155
  %1279 = vmatprep.subr.mxu0 0.0
  %1280 = vmatpush1.msra.mxu0 %v1156
  %1281 = vmatprep.subr.mxu0 0.0
  %1282 = vmatpush1.msra.mxu0 %v1157
  %1283 = vmatprep.subr.mxu0 0.0
  %1284 = vmatpush1.msra.mxu0 0.0
  %1285 = vmatprep.subr.mxu0 0.0
  %1286 = vmatpush1.msra.mxu0 0.0
  %1287 = vmatprep.subr.mxu0 0.0
  %1288 = vmatpush1.msra.mxu0 0.0
  %1289 = vmatprep.subr.mxu0 0.0
  %1290 = vmatpush1.msra.mxu0 0.0
  %1291 = vmatprep.subr.mxu0 0.0
  %1292 = vmatpush1.msra.mxu0 0.0
  %1293 = vmatprep.subr.mxu0 0.0
  %1294 = vmatpush1.msra.mxu0 0.0
  %1295 = vmatprep.subr.mxu0 0.0
  %1296 = vmatpush1.msra.mxu0 0.0
  %1297 = vmatprep.subr.mxu0 0.0
  %1298 = vmatpush1.msra.mxu0 0.0
  %1299 = vmatprep.subr.mxu0 0.0
  %1300 = vmatpush1.msra.mxu0 0.0
  %1301 = vmatprep.subr.mxu0 0.0
  %1302 = vmatpush1.msra.mxu0 0.0
  %1303 = vmatprep.subr.mxu0 0.0
  %1304 = vmatpush1.msra.mxu0 0.0
  %1305 = vmatprep.subr.mxu0 0.0
  %1306 = vmatpush1.msra.mxu0 0.0
  %1307 = vmatprep.subr.mxu0 0.0
  %1308 = vmatpush1.msra.mxu0 0.0
  %1309 = vmatprep.subr.mxu0 0.0
  %1310 = vmatpush1.msra.mxu0 0.0
  %1311 = vmatprep.subr.mxu0 0.0
  %1312 = vmatpush1.msra.mxu0 0.0
  %1313 = vmatprep.subr.mxu0 0.0
  %1314 = vmatpush1.msra.mxu0 0.0
  %1315 = vmatprep.subr.mxu0 0.0
  %1316 = vmatpush1.msra.mxu0 0.0
  %1317 = vmatprep.subr.mxu0 0.0
  %1318 = vmatpush1.msra.mxu0 0.0
  %1319 = vmatprep.subr.mxu0 0.0
  %1320 = vmatpush1.msra.mxu0 0.0
  %1321 = vmatprep.subr.mxu0 0.0
  %1322 = vmatpush1.msra.mxu0 0.0
  %1323 = vmatprep.subr.mxu0 0.0
  %1324 = vmatpush1.msra.mxu0 0.0
  %1325 = vmatprep.subr.mxu0 0.0
  %1326 = vmatpush1.msra.mxu0 0.0
  %1327 = vmatprep.subr.mxu0 0.0
  %1328 = vmatpush1.msra.mxu0 0.0
  %1329 = vmatprep.subr.mxu0 0.0
  %1330 = vmatpush1.msra.mxu0 0.0
  %1331 = vmatprep.subr.mxu0 0.0
  %1332 = vmatpush1.msra.mxu0 0.0
  %1333 = vmatprep.subr.mxu0 0.0
  %1334 = vmatpush1.msra.mxu0 0.0
  %1335 = vmatprep.subr.mxu0 0.0
  %1336 = vmatpush1.msra.mxu0 0.0
  %1337 = vmatprep.subr.mxu0 0.0
  %1338 = vmatpush1.msra.mxu0 0.0
  %1339 = vmatprep.mubr.f32.mxu0 0.0
  %1340 = vmatmul.mubr.f32.gmra.mrb[0].mxu0 %v345
  %v1341 = vpop.f32.mrb[0].mxu0
  %v1342 = vadd.f32 0.0, %v1341
  %v1343 = vpop.f32.mrb[0].mxu0
  %1344 = vdwg.mxu0
  %v1345 = vadd.f32 %v1237, %v1342
  %v1346 = vxor.u32 %v1345, 2147483648
  %v1347 = vmul.f32 %v1346, 1.442695
  %v1348 = vpow.pop %v1347
  %v1349 = vadd.f32 %v1348, 1.0
  %v1350 = vrcp.pop %v1349
  %v1351 = vmul.f32 1.0, %v1350
  %v1352 = vtanh.pop %v1345
  %v1353 = vsel %vm198, %v1351, %v1352
  %v1354 = vmul.f32 %v1353, 0.0
  %1356 = vrot.lane.b32.xlu0 %v1353, 32
  %v1357 = vpop.permute.xlu0 %1356
  %v1359 = vmul.f32 %v1353, %v1357
  %1361 = vrot.lane.b32.xlu0 %v1359, 32
  %v1362 = vpop.permute.xlu0 %1361
  %v1364 = vadd.f32 %v1354, %v1362
  %v1365 = vtanh.pop %v1364
  %1367 = vrot.lane.b32.xlu0 %v1365, 32
  %v1368 = vpop.permute.xlu0 %1367
  %v1370 = vmul.f32 %v1353, %v1368
  %1372 = vrot.lane.b32.xlu0 %v1370, 64
  %v1373 = vpop.permute.xlu0 %1372
  %v1374 = vsel %vm214, %v1373, 0
  %1376 = vmatprep.subr.mxu0 0.0
  %1377 = vmatpush1.msra.mxu0 %v1154
  %1378 = vmatprep.subr.mxu0 0.0
  %1379 = vmatpush1.msra.mxu0 %v1155
  %1380 = vmatprep.subr.mxu0 0.0
  %1381 = vmatpush1.msra.mxu0 %v1156
  %1382 = vmatprep.subr.mxu0 0.0
  %1383 = vmatpush1.msra.mxu0 %v1157
  %1384 = vmatprep.subr.mxu0 0.0
  %1385 = vmatpush1.msra.mxu0 0.0
  %1386 = vmatprep.subr.mxu0 0.0
  %1387 = vmatpush1.msra.mxu0 0.0
  %1388 = vmatprep.subr.mxu0 0.0
  %1389 = vmatpush1.msra.mxu0 0.0
  %1390 = vmatprep.subr.mxu0 0.0
  %1391 = vmatpush1.msra.mxu0 0.0
  %1392 = vmatprep.subr.mxu0 0.0
  %1393 = vmatpush1.msra.mxu0 0.0
  %1394 = vmatprep.subr.mxu0 0.0
  %1395 = vmatpush1.msra.mxu0 0.0
  %1396 = vmatprep.subr.mxu0 0.0
  %1397 = vmatpush1.msra.mxu0 0.0
  %1398 = vmatprep.subr.mxu0 0.0
  %1399 = vmatpush1.msra.mxu0 0.0
  %1400 = vmatprep.subr.mxu0 0.0
  %1401 = vmatpush1.msra.mxu0 0.0
  %1402 = vmatprep.subr.mxu0 0.0
  %1403 = vmatpush1.msra.mxu0 0.0
  %1404 = vmatprep.subr.mxu0 0.0
  %1405 = vmatpush1.msra.mxu0 0.0
  %1406 = vmatprep.subr.mxu0 0.0
  %1407 = vmatpush1.msra.mxu0 0.0
  %1408 = vmatprep.subr.mxu0 0.0
  %1409 = vmatpush1.msra.mxu0 0.0
  %1410 = vmatprep.subr.mxu0 0.0
  %1411 = vmatpush1.msra.mxu0 0.0
  %1412 = vmatprep.subr.mxu0 0.0
  %1413 = vmatpush1.msra.mxu0 0.0
  %1414 = vmatprep.subr.mxu0 0.0
  %1415 = vmatpush1.msra.mxu0 0.0
  %1416 = vmatprep.subr.mxu0 0.0
  %1417 = vmatpush1.msra.mxu0 0.0
  %1418 = vmatprep.subr.mxu0 0.0
  %1419 = vmatpush1.msra.mxu0 0.0
  %1420 = vmatprep.subr.mxu0 0.0
  %1421 = vmatpush1.msra.mxu0 0.0
  %1422 = vmatprep.subr.mxu0 0.0
  %1423 = vmatpush1.msra.mxu0 0.0
  %1424 = vmatprep.subr.mxu0 0.0
  %1425 = vmatpush1.msra.mxu0 0.0
  %1426 = vmatprep.subr.mxu0 0.0
  %1427 = vmatpush1.msra.mxu0 0.0
  %1428 = vmatprep.subr.mxu0 0.0
  %1429 = vmatpush1.msra.mxu0 0.0
  %1430 = vmatprep.subr.mxu0 0.0
  %1431 = vmatpush1.msra.mxu0 0.0
  %1432 = vmatprep.subr.mxu0 0.0
  %1433 = vmatpush1.msra.mxu0 0.0
  %1434 = vmatprep.subr.mxu0 0.0
  %1435 = vmatpush1.msra.mxu0 0.0
  %1436 = vmatprep.subr.mxu0 0.0
  %1437 = vmatpush1.msra.mxu0 0.0
  %1438 = vmatprep.subr.mxu0 0.0
  %1439 = vmatpush1.msra.mxu0 0.0
  %1440 = vmatprep.mubr.f32.mxu0 0.0
  %1441 = vmatmul.mubr.f32.gmra.mrb[0].mxu0 %v1374
  %v1442 = vpop.f32.mrb[0].mxu0
  %v1443 = vadd.f32 0.0, %v1442
  %v1444 = vpop.f32.mrb[0].mxu0
  %1445 = vdwg.mxu0
  %v1446 = vadd.f32 %v1242, %v1443
  %v1447 = vxor.u32 %v1446, 2147483648
  %v1448 = vmul.f32 %v1447, 1.442695
  %v1449 = vpow.pop %v1448
  %v1450 = vadd.f32 %v1449, 1.0
  %v1451 = vrcp.pop %v1450
  %v1452 = vmul.f32 1.0, %v1451
  %v1453 = vtanh.pop %v1446
  %v1454 = vsel %vm198, %v1452, %v1453
  %v1455 = vmul.f32 %v1454, %v1364
  %1457 = vrot.lane.b32.xlu0 %v1454, 32
  %v1458 = vpop.permute.xlu0 %1457
  %v1460 = vmul.f32 %v1454, %v1458
  %1462 = vrot.lane.b32.xlu0 %v1460, 32
  %v1463 = vpop.permute.xlu0 %1462
  %v1465 = vadd.f32 %v1455, %v1463
  %v1466 = vtanh.pop %v1465
  %1468 = vrot.lane.b32.xlu0 %v1466, 32
  %v1469 = vpop.permute.xlu0 %1468
  %v1471 = vmul.f32 %v1454, %v1469
  %1473 = vrot.lane.b32.xlu0 %v1471, 64
  %v1474 = vpop.permute.xlu0 %1473
  %v1475 = vsel %vm214, %v1474, 0
  %1477 = vmatprep.subr.mxu0 0.0
  %1478 = vmatpush1.msra.mxu0 %v1154
  %1479 = vmatprep.subr.mxu0 0.0
  %1480 = vmatpush1.msra.mxu0 %v1155
  %1481 = vmatprep.subr.mxu0 0.0
  %1482 = vmatpush1.msra.mxu0 %v1156
  %1483 = vmatprep.subr.mxu0 0.0
  %1484 = vmatpush1.msra.mxu0 %v1157
  %1485 = vmatprep.subr.mxu0 0.0
  %1486 = vmatpush1.msra.mxu0 0.0
  %1487 = vmatprep.subr.mxu0 0.0
  %1488 = vmatpush1.msra.mxu0 0.0
  %1489 = vmatprep.subr.mxu0 0.0
  %1490 = vmatpush1.msra.mxu0 0.0
  %1491 = vmatprep.subr.mxu0 0.0
  %1492 = vmatpush1.msra.mxu0 0.0
  %1493 = vmatprep.subr.mxu0 0.0
  %1494 = vmatpush1.msra.mxu0 0.0
  %1495 = vmatprep.subr.mxu0 0.0
  %1496 = vmatpush1.msra.mxu0 0.0
  %1497 = vmatprep.subr.mxu0 0.0
  %1498 = vmatpush1.msra.mxu0 0.0
  %1499 = vmatprep.subr.mxu0 0.0
  %1500 = vmatpush1.msra.mxu0 0.0
  %1501 = vmatprep.subr.mxu0 0.0
  %1502 = vmatpush1.msra.mxu0 0.0
  %1503 = vmatprep.subr.mxu0 0.0
  %1504 = vmatpush1.msra.mxu0 0.0
  %1505 = vmatprep.subr.mxu0 0.0
  %1506 = vmatpush1.msra.mxu0 0.0
  %1507 = vmatprep.subr.mxu0 0.0
  %1508 = vmatpush1.msra.mxu0 0.0
  %1509 = vmatprep.subr.mxu0 0.0
  %1510 = vmatpush1.msra.mxu0 0.0
  %1511 = vmatprep.subr.mxu0 0.0
  %1512 = vmatpush1.msra.mxu0 0.0
  %1513 = vmatprep.subr.mxu0 0.0
  %1514 = vmatpush1.msra.mxu0 0.0
  %1515 = vmatprep.subr.mxu0 0.0
  %1516 = vmatpush1.msra.mxu0 0.0
  %1517 = vmatprep.subr.mxu0 0.0
  %1518 = vmatpush1.msra.mxu0 0.0
  %1519 = vmatprep.subr.mxu0 0.0
  %1520 = vmatpush1.msra.mxu0 0.0
  %1521 = vmatprep.subr.mxu0 0.0
  %1522 = vmatpush1.msra.mxu0 0.0
  %1523 = vmatprep.subr.mxu0 0.0
  %1524 = vmatpush1.msra.mxu0 0.0
  %1525 = vmatprep.subr.mxu0 0.0
  %1526 = vmatpush1.msra.mxu0 0.0
  %1527 = vmatprep.subr.mxu0 0.0
  %1528 = vmatpush1.msra.mxu0 0.0
  %1529 = vmatprep.subr.mxu0 0.0
  %1530 = vmatpush1.msra.mxu0 0.0
  %1531 = vmatprep.subr.mxu0 0.0
  %1532 = vmatpush1.msra.mxu0 0.0
  %1533 = vmatprep.subr.mxu0 0.0
  %1534 = vmatpush1.msra.mxu0 0.0
  %1535 = vmatprep.subr.mxu0 0.0
  %1536 = vmatpush1.msra.mxu0 0.0
  %1537 = vmatprep.subr.mxu0 0.0
  %1538 = vmatpush1.msra.mxu0 0.0
  %1539 = vmatprep.subr.mxu0 0.0
  %1540 = vmatpush1.msra.mxu0 0.0
  %1541 = vmatprep.mubr.f32.mxu0 0.0
  %1542 = vmatmul.mubr.f32.gmra.mrb[0].mxu0 %v1475
  %v1543 = vpop.f32.mrb[0].mxu0
  %v1544 = vadd.f32 0.0, %v1543
  %v1545 = vpop.f32.mrb[0].mxu0
  %1546 = vdwg.mxu0
  %v1547 = vadd.f32 %v1247, %v1544
  %v1548 = vxor.u32 %v1547, 2147483648
  %v1549 = vmul.f32 %v1548, 1.442695
  %v1550 = vpow.pop %v1549
  %v1551 = vadd.f32 %v1550, 1.0
  %v1552 = vrcp.pop %v1551
  %v1553 = vmul.f32 1.0, %v1552
  %v1554 = vtanh.pop %v1547
  %v1555 = vsel %vm198, %v1553, %v1554
  %v1556 = vmul.f32 %v1555, %v1465
  %1558 = vrot.lane.b32.xlu0 %v1555, 32
  %v1559 = vpop.permute.xlu0 %1558
  %v1561 = vmul.f32 %v1555, %v1559
  %1563 = vrot.lane.b32.xlu0 %v1561, 32
  %v1564 = vpop.permute.xlu0 %1563
  %v1566 = vadd.f32 %v1556, %v1564
  %v1567 = vtanh.pop %v1566
  %1569 = vrot.lane.b32.xlu0 %v1567, 32
  %v1570 = vpop.permute.xlu0 %1569
  %v1572 = vmul.f32 %v1555, %v1570
  %1574 = vrot.lane.b32.xlu0 %v1572, 64
  %v1575 = vpop.permute.xlu0 %1574
  %v1576 = vsel %vm214, %v1575, 0
  %1578 = vmatprep.subr.mxu0 0.0
  %1579 = vmatpush1.msra.mxu0 %v1154
  %1580 = vmatprep.subr.mxu0 0.0
  %1581 = vmatpush1.msra.mxu0 %v1155
  %1582 = vmatprep.subr.mxu0 0.0
  %1583 = vmatpush1.msra.mxu0 %v1156
  %1584 = vmatprep.subr.mxu0 0.0
  %1585 = vmatpush1.msra.mxu0 %v1157
  %1586 = vmatprep.subr.mxu0 0.0
  %1587 = vmatpush1.msra.mxu0 0.0
  %1588 = vmatprep.subr.mxu0 0.0
  %1589 = vmatpush1.msra.mxu0 0.0
  %1590 = vmatprep.subr.mxu0 0.0
  %1591 = vmatpush1.msra.mxu0 0.0
  %1592 = vmatprep.subr.mxu0 0.0
  %1593 = vmatpush1.msra.mxu0 0.0
  %1594 = vmatprep.subr.mxu0 0.0
  %1595 = vmatpush1.msra.mxu0 0.0
  %1596 = vmatprep.subr.mxu0 0.0
  %1597 = vmatpush1.msra.mxu0 0.0
  %1598 = vmatprep.subr.mxu0 0.0
  %1599 = vmatpush1.msra.mxu0 0.0
  %1600 = vmatprep.subr.mxu0 0.0
  %1601 = vmatpush1.msra.mxu0 0.0
  %1602 = vmatprep.subr.mxu0 0.0
  %1603 = vmatpush1.msra.mxu0 0.0
  %1604 = vmatprep.subr.mxu0 0.0
  %1605 = vmatpush1.msra.mxu0 0.0
  %1606 = vmatprep.subr.mxu0 0.0
  %1607 = vmatpush1.msra.mxu0 0.0
  %1608 = vmatprep.subr.mxu0 0.0
  %1609 = vmatpush1.msra.mxu0 0.0
  %1610 = vmatprep.subr.mxu0 0.0
  %1611 = vmatpush1.msra.mxu0 0.0
  %1612 = vmatprep.subr.mxu0 0.0
  %1613 = vmatpush1.msra.mxu0 0.0
  %1614 = vmatprep.subr.mxu0 0.0
  %1615 = vmatpush1.msra.mxu0 0.0
  %1616 = vmatprep.subr.mxu0 0.0
  %1617 = vmatpush1.msra.mxu0 0.0
  %1618 = vmatprep.subr.mxu0 0.0
  %1619 = vmatpush1.msra.mxu0 0.0
  %1620 = vmatprep.subr.mxu0 0.0
  %1621 = vmatpush1.msra.mxu0 0.0
  %1622 = vmatprep.subr.mxu0 0.0
  %1623 = vmatpush1.msra.mxu0 0.0
  %1624 = vmatprep.subr.mxu0 0.0
  %1625 = vmatpush1.msra.mxu0 0.0
  %1626 = vmatprep.subr.mxu0 0.0
  %1627 = vmatpush1.msra.mxu0 0.0
  %1628 = vmatprep.subr.mxu0 0.0
  %1629 = vmatpush1.msra.mxu0 0.0
  %1630 = vmatprep.subr.mxu0 0.0
  %1631 = vmatpush1.msra.mxu0 0.0
  %1632 = vmatprep.subr.mxu0 0.0
  %1633 = vmatpush1.msra.mxu0 0.0
  %1634 = vmatprep.subr.mxu0 0.0
  %1635 = vmatpush1.msra.mxu0 0.0
  %1636 = vmatprep.subr.mxu0 0.0
  %1637 = vmatpush1.msra.mxu0 0.0
  %1638 = vmatprep.subr.mxu0 0.0
  %1639 = vmatpush1.msra.mxu0 0.0
  %1640 = vmatprep.subr.mxu0 0.0
  %1641 = vmatpush1.msra.mxu0 0.0
  %1642 = vmatprep.mubr.f32.mxu0 0.0
  %1643 = vmatmul.mubr.f32.gmra.mrb[0].mxu0 %v1576
  %v1644 = vpop.f32.mrb[0].mxu0
  %v1645 = vadd.f32 0.0, %v1644
  %v1646 = vpop.f32.mrb[0].mxu0
  %1647 = vdwg.mxu0
  %v1648 = vadd.f32 %v1252, %v1645
  %v1649 = vxor.u32 %v1648, 2147483648
  %v1650 = vmul.f32 %v1649, 1.442695
  %v1651 = vpow.pop %v1650
  %v1652 = vadd.f32 %v1651, 1.0
  %v1653 = vrcp.pop %v1652
  %v1654 = vmul.f32 1.0, %v1653
  %v1655 = vtanh.pop %v1648
  %v1656 = vsel %vm198, %v1654, %v1655
  %v1657 = vmul.f32 %v1656, %v1566
  %1659 = vrot.lane.b32.xlu0 %v1656, 32
  %v1660 = vpop.permute.xlu0 %1659
  %v1662 = vmul.f32 %v1656, %v1660
  %1664 = vrot.lane.b32.xlu0 %v1662, 32
  %v1665 = vpop.permute.xlu0 %1664
  %v1667 = vadd.f32 %v1657, %v1665
  %v1668 = vtanh.pop %v1667
  %1670 = vrot.lane.b32.xlu0 %v1668, 32
  %v1671 = vpop.permute.xlu0 %1670
  %v1673 = vmul.f32 %v1656, %v1671
  %1675 = vrot.lane.b32.xlu0 %v1673, 64
  %v1676 = vpop.permute.xlu0 %1675
  %v1677 = vsel %vm214, %v1676, 0
  %1679 = vmatprep.subr.mxu0 0.0
  %1680 = vmatpush1.msra.mxu0 %v1154
  %1681 = vmatprep.subr.mxu0 0.0
  %1682 = vmatpush1.msra.mxu0 %v1155
  %1683 = vmatprep.subr.mxu0 0.0
  %1684 = vmatpush1.msra.mxu0 %v1156
  %1685 = vmatprep.subr.mxu0 0.0
  %1686 = vmatpush1.msra.mxu0 %v1157
  %1687 = vmatprep.subr.mxu0 0.0
  %1688 = vmatpush1.msra.mxu0 0.0
  %1689 = vmatprep.subr.mxu0 0.0
  %1690 = vmatpush1.msra.mxu0 0.0
  %1691 = vmatprep.subr.mxu0 0.0
  %1692 = vmatpush1.msra.mxu0 0.0
  %1693 = vmatprep.subr.mxu0 0.0
  %1694 = vmatpush1.msra.mxu0 0.0
  %1695 = vmatprep.subr.mxu0 0.0
  %1696 = vmatpush1.msra.mxu0 0.0
  %1697 = vmatprep.subr.mxu0 0.0
  %1698 = vmatpush1.msra.mxu0 0.0
  %1699 = vmatprep.subr.mxu0 0.0
  %1700 = vmatpush1.msra.mxu0 0.0
  %1701 = vmatprep.subr.mxu0 0.0
  %1702 = vmatpush1.msra.mxu0 0.0
  %1703 = vmatprep.subr.mxu0 0.0
  %1704 = vmatpush1.msra.mxu0 0.0
  %1705 = vmatprep.subr.mxu0 0.0
  %1706 = vmatpush1.msra.mxu0 0.0
  %1707 = vmatprep.subr.mxu0 0.0
  %1708 = vmatpush1.msra.mxu0 0.0
  %1709 = vmatprep.subr.mxu0 0.0
  %1710 = vmatpush1.msra.mxu0 0.0
  %1711 = vmatprep.subr.mxu0 0.0
  %1712 = vmatpush1.msra.mxu0 0.0
  %1713 = vmatprep.subr.mxu0 0.0
  %1714 = vmatpush1.msra.mxu0 0.0
  %1715 = vmatprep.subr.mxu0 0.0
  %1716 = vmatpush1.msra.mxu0 0.0
  %1717 = vmatprep.subr.mxu0 0.0
  %1718 = vmatpush1.msra.mxu0 0.0
  %1719 = vmatprep.subr.mxu0 0.0
  %1720 = vmatpush1.msra.mxu0 0.0
  %1721 = vmatprep.subr.mxu0 0.0
  %1722 = vmatpush1.msra.mxu0 0.0
  %1723 = vmatprep.subr.mxu0 0.0
  %1724 = vmatpush1.msra.mxu0 0.0
  %1725 = vmatprep.subr.mxu0 0.0
  %1726 = vmatpush1.msra.mxu0 0.0
  %1727 = vmatprep.subr.mxu0 0.0
  %1728 = vmatpush1.msra.mxu0 0.0
  %1729 = vmatprep.subr.mxu0 0.0
  %1730 = vmatpush1.msra.mxu0 0.0
  %1731 = vmatprep.subr.mxu0 0.0
  %1732 = vmatpush1.msra.mxu0 0.0
  %1733 = vmatprep.subr.mxu0 0.0
  %1734 = vmatpush1.msra.mxu0 0.0
  %1735 = vmatprep.subr.mxu0 0.0
  %1736 = vmatpush1.msra.mxu0 0.0
  %1737 = vmatprep.subr.mxu0 0.0
  %1738 = vmatpush1.msra.mxu0 0.0
  %1739 = vmatprep.subr.mxu0 0.0
  %1740 = vmatpush1.msra.mxu0 0.0
  %1741 = vmatprep.subr.mxu0 0.0
  %1742 = vmatpush1.msra.mxu0 0.0
  %1743 = vmatprep.mubr.f32.mxu0 0.0
  %1744 = vmatmul.mubr.f32.gmra.mrb[0].mxu0 %v1677
  %v1745 = vpop.f32.mrb[0].mxu0
  %v1746 = vadd.f32 0.0, %v1745
  %v1747 = vpop.f32.mrb[0].mxu0
  %1748 = vdwg.mxu0
  %v1749 = vadd.f32 %v1257, %v1746
  %v1750 = vxor.u32 %v1749, 2147483648
  %v1751 = vmul.f32 %v1750, 1.442695
  %v1752 = vpow.pop %v1751
  %v1753 = vadd.f32 %v1752, 1.0
  %v1754 = vrcp.pop %v1753
  %v1755 = vmul.f32 1.0, %v1754
  %v1756 = vtanh.pop %v1749
  %v1757 = vsel %vm198, %v1755, %v1756
  %v1758 = vmul.f32 %v1757, %v1667
  %1760 = vrot.lane.b32.xlu0 %v1757, 32
  %v1761 = vpop.permute.xlu0 %1760
  %v1763 = vmul.f32 %v1757, %v1761
  %1765 = vrot.lane.b32.xlu0 %v1763, 32
  %v1766 = vpop.permute.xlu0 %1765
  %v1768 = vadd.f32 %v1758, %v1766
  %v1769 = vtanh.pop %v1768
  %1771 = vrot.lane.b32.xlu0 %v1769, 32
  %v1772 = vpop.permute.xlu0 %1771
  %v1774 = vmul.f32 %v1757, %v1772
  %1776 = vrot.lane.b32.xlu0 %v1774, 64
  %v1777 = vpop.permute.xlu0 %1776
  %v1778 = vsel %vm214, %v1777, 0
  %1780 = vmatprep.subr.mxu0 0.0
  %1781 = vmatpush1.msra.mxu0 %v1154
  %1782 = vmatprep.subr.mxu0 0.0
  %1783 = vmatpush1.msra.mxu0 %v1155
  %1784 = vmatprep.subr.mxu0 0.0
  %1785 = vmatpush1.msra.mxu0 %v1156
  %1786 = vmatprep.subr.mxu0 0.0
  %1787 = vmatpush1.msra.mxu0 %v1157
  %1788 = vmatprep.subr.mxu0 0.0
  %1789 = vmatpush1.msra.mxu0 0.0
  %1790 = vmatprep.subr.mxu0 0.0
  %1791 = vmatpush1.msra.mxu0 0.0
  %1792 = vmatprep.subr.mxu0 0.0
  %1793 = vmatpush1.msra.mxu0 0.0
  %1794 = vmatprep.subr.mxu0 0.0
  %1795 = vmatpush1.msra.mxu0 0.0
  %1796 = vmatprep.subr.mxu0 0.0
  %1797 = vmatpush1.msra.mxu0 0.0
  %1798 = vmatprep.subr.mxu0 0.0
  %1799 = vmatpush1.msra.mxu0 0.0
  %1800 = vmatprep.subr.mxu0 0.0
  %1801 = vmatpush1.msra.mxu0 0.0
  %1802 = vmatprep.subr.mxu0 0.0
  %1803 = vmatpush1.msra.mxu0 0.0
  %1804 = vmatprep.subr.mxu0 0.0
  %1805 = vmatpush1.msra.mxu0 0.0
  %1806 = vmatprep.subr.mxu0 0.0
  %1807 = vmatpush1.msra.mxu0 0.0
  %1808 = vmatprep.subr.mxu0 0.0
  %1809 = vmatpush1.msra.mxu0 0.0
  %1810 = vmatprep.subr.mxu0 0.0
  %1811 = vmatpush1.msra.mxu0 0.0
  %1812 = vmatprep.subr.mxu0 0.0
  %1813 = vmatpush1.msra.mxu0 0.0
  %1814 = vmatprep.subr.mxu0 0.0
  %1815 = vmatpush1.msra.mxu0 0.0
  %1816 = vmatprep.subr.mxu0 0.0
  %1817 = vmatpush1.msra.mxu0 0.0
  %1818 = vmatprep.subr.mxu0 0.0
  %1819 = vmatpush1.msra.mxu0 0.0
  %1820 = vmatprep.subr.mxu0 0.0
  %1821 = vmatpush1.msra.mxu0 0.0
  %1822 = vmatprep.subr.mxu0 0.0
  %1823 = vmatpush1.msra.mxu0 0.0
  %1824 = vmatprep.subr.mxu0 0.0
  %1825 = vmatpush1.msra.mxu0 0.0
  %1826 = vmatprep.subr.mxu0 0.0
  %1827 = vmatpush1.msra.mxu0 0.0
  %1828 = vmatprep.subr.mxu0 0.0
  %1829 = vmatpush1.msra.mxu0 0.0
  %1830 = vmatprep.subr.mxu0 0.0
  %1831 = vmatpush1.msra.mxu0 0.0
  %1832 = vmatprep.subr.mxu0 0.0
  %1833 = vmatpush1.msra.mxu0 0.0
  %1834 = vmatprep.subr.mxu0 0.0
  %1835 = vmatpush1.msra.mxu0 0.0
  %1836 = vmatprep.subr.mxu0 0.0
  %1837 = vmatpush1.msra.mxu0 0.0
  %1838 = vmatprep.subr.mxu0 0.0
  %1839 = vmatpush1.msra.mxu0 0.0
  %1840 = vmatprep.subr.mxu0 0.0
  %1841 = vmatpush1.msra.mxu0 0.0
  %1842 = vmatprep.subr.mxu0 0.0
  %1843 = vmatpush1.msra.mxu0 0.0
  %1844 = vmatprep.mubr.f32.mxu0 0.0
  %1845 = vmatmul.mubr.f32.gmra.mrb[0].mxu0 %v1778
  %v1846 = vpop.f32.mrb[0].mxu0
  %v1847 = vadd.f32 0.0, %v1846
  %v1848 = vpop.f32.mrb[0].mxu0
  %1849 = vdwg.mxu0
  %v1850 = vadd.f32 %v1262, %v1847
  %v1851 = vxor.u32 %v1850, 2147483648
  %v1852 = vmul.f32 %v1851, 1.442695
  %v1853 = vpow.pop %v1852
  %v1854 = vadd.f32 %v1853, 1.0
  %v1855 = vrcp.pop %v1854
  %v1856 = vmul.f32 1.0, %v1855
  %v1857 = vtanh.pop %v1850
  %v1858 = vsel %vm198, %v1856, %v1857
  %v1859 = vmul.f32 %v1858, %v1768
  %1861 = vrot.lane.b32.xlu0 %v1858, 32
  %v1862 = vpop.permute.xlu0 %1861
  %v1864 = vmul.f32 %v1858, %v1862
  %1866 = vrot.lane.b32.xlu0 %v1864, 32
  %v1867 = vpop.permute.xlu0 %1866
  %v1869 = vadd.f32 %v1859, %v1867
  %v1870 = vtanh.pop %v1869
  %1872 = vrot.lane.b32.xlu0 %v1870, 32
  %v1873 = vpop.permute.xlu0 %1872
  %v1875 = vmul.f32 %v1858, %v1873
  %1877 = vrot.lane.b32.xlu0 %v1875, 64
  %v1878 = vpop.permute.xlu0 %1877
  %v1879 = vsel %vm214, %v1878, 0
  %1881 = vmatprep.subr.mxu0 0.0
  %1882 = vmatpush1.msra.mxu0 %v1154
  %1883 = vmatprep.subr.mxu0 0.0
  %1884 = vmatpush1.msra.mxu0 %v1155
  %1885 = vmatprep.subr.mxu0 0.0
  %1886 = vmatpush1.msra.mxu0 %v1156
  %1887 = vmatprep.subr.mxu0 0.0
  %1888 = vmatpush1.msra.mxu0 %v1157
  %1889 = vmatprep.subr.mxu0 0.0
  %1890 = vmatpush1.msra.mxu0 0.0
  %1891 = vmatprep.subr.mxu0 0.0
  %1892 = vmatpush1.msra.mxu0 0.0
  %1893 = vmatprep.subr.mxu0 0.0
  %1894 = vmatpush1.msra.mxu0 0.0
  %1895 = vmatprep.subr.mxu0 0.0
  %1896 = vmatpush1.msra.mxu0 0.0
  %1897 = vmatprep.subr.mxu0 0.0
  %1898 = vmatpush1.msra.mxu0 0.0
  %1899 = vmatprep.subr.mxu0 0.0
  %1900 = vmatpush1.msra.mxu0 0.0
  %1901 = vmatprep.subr.mxu0 0.0
  %1902 = vmatpush1.msra.mxu0 0.0
  %1903 = vmatprep.subr.mxu0 0.0
  %1904 = vmatpush1.msra.mxu0 0.0
  %1905 = vmatprep.subr.mxu0 0.0
  %1906 = vmatpush1.msra.mxu0 0.0
  %1907 = vmatprep.subr.mxu0 0.0
  %1908 = vmatpush1.msra.mxu0 0.0
  %1909 = vmatprep.subr.mxu0 0.0
  %1910 = vmatpush1.msra.mxu0 0.0
  %1911 = vmatprep.subr.mxu0 0.0
  %1912 = vmatpush1.msra.mxu0 0.0
  %1913 = vmatprep.subr.mxu0 0.0
  %1914 = vmatpush1.msra.mxu0 0.0
  %1915 = vmatprep.subr.mxu0 0.0
  %1916 = vmatpush1.msra.mxu0 0.0
  %1917 = vmatprep.subr.mxu0 0.0
  %1918 = vmatpush1.msra.mxu0 0.0
  %1919 = vmatprep.subr.mxu0 0.0
  %1920 = vmatpush1.msra.mxu0 0.0
  %1921 = vmatprep.subr.mxu0 0.0
  %1922 = vmatpush1.msra.mxu0 0.0
  %1923 = vmatprep.subr.mxu0 0.0
  %1924 = vmatpush1.msra.mxu0 0.0
  %1925 = vmatprep.subr.mxu0 0.0
  %1926 = vmatpush1.msra.mxu0 0.0
  %1927 = vmatprep.subr.mxu0 0.0
  %1928 = vmatpush1.msra.mxu0 0.0
  %1929 = vmatprep.subr.mxu0 0.0
  %1930 = vmatpush1.msra.mxu0 0.0
  %1931 = vmatprep.subr.mxu0 0.0
  %1932 = vmatpush1.msra.mxu0 0.0
  %1933 = vmatprep.subr.mxu0 0.0
  %1934 = vmatpush1.msra.mxu0 0.0
  %1935 = vmatprep.subr.mxu0 0.0
  %1936 = vmatpush1.msra.mxu0 0.0
  %1937 = vmatprep.subr.mxu0 0.0
  %1938 = vmatpush1.msra.mxu0 0.0
  %1939 = vmatprep.subr.mxu0 0.0
  %1940 = vmatpush1.msra.mxu0 0.0
  %1941 = vmatprep.subr.mxu0 0.0
  %1942 = vmatpush1.msra.mxu0 0.0
  %1943 = vmatprep.subr.mxu0 0.0
  %1944 = vmatpush1.msra.mxu0 0.0
  %1945 = vmatprep.mubr.f32.mxu0 0.0
  %1946 = vmatmul.mubr.f32.gmra.mrb[0].mxu0 %v1879
  %v1947 = vpop.f32.mrb[0].mxu0
  %v1948 = vadd.f32 0.0, %v1947
  %v1949 = vpop.f32.mrb[0].mxu0
  %1950 = vdwg.mxu0
  %v1951 = vadd.f32 %v1267, %v1948
  %v1952 = vxor.u32 %v1951, 2147483648
  %v1953 = vmul.f32 %v1952, 1.442695
  %v1954 = vpow.pop %v1953
  %v1955 = vadd.f32 %v1954, 1.0
  %v1956 = vrcp.pop %v1955
  %v1957 = vmul.f32 1.0, %v1956
  %v1958 = vtanh.pop %v1951
  %v1959 = vsel %vm198, %v1957, %v1958
  %v1960 = vmul.f32 %v1959, %v1869
  %1962 = vrot.lane.b32.xlu0 %v1959, 32
  %v1963 = vpop.permute.xlu0 %1962
  %v1965 = vmul.f32 %v1959, %v1963
  %1967 = vrot.lane.b32.xlu0 %v1965, 32
  %v1968 = vpop.permute.xlu0 %1967
  %v1970 = vadd.f32 %v1960, %v1968
  %v1971 = vtanh.pop %v1970
  %1973 = vrot.lane.b32.xlu0 %v1971, 32
  %v1974 = vpop.permute.xlu0 %1973
  %v1976 = vmul.f32 %v1959, %v1974
  %1978 = vrot.lane.b32.xlu0 %v1976, 64
  %v1979 = vpop.permute.xlu0 %1978
  %v1980 = vsel %vm214, %v1979, 0
  %1982 = vmatprep.subr.mxu0 0.0
  %1983 = vmatpush1.msra.mxu0 %v1154
  %1984 = vmatprep.subr.mxu0 0.0
  %1985 = vmatpush1.msra.mxu0 %v1155
  %1986 = vmatprep.subr.mxu0 0.0
  %1987 = vmatpush1.msra.mxu0 %v1156
  %1988 = vmatprep.subr.mxu0 0.0
  %1989 = vmatpush1.msra.mxu0 %v1157
  %1990 = vmatprep.subr.mxu0 0.0
  %1991 = vmatpush1.msra.mxu0 0.0
  %1992 = vmatprep.subr.mxu0 0.0
  %1993 = vmatpush1.msra.mxu0 0.0
  %1994 = vmatprep.subr.mxu0 0.0
  %1995 = vmatpush1.msra.mxu0 0.0
  %1996 = vmatprep.subr.mxu0 0.0
  %1997 = vmatpush1.msra.mxu0 0.0
  %1998 = vmatprep.subr.mxu0 0.0
  %1999 = vmatpush1.msra.mxu0 0.0
  %2000 = vmatprep.subr.mxu0 0.0
  %2001 = vmatpush1.msra.mxu0 0.0
  %2002 = vmatprep.subr.mxu0 0.0
  %2003 = vmatpush1.msra.mxu0 0.0
  %2004 = vmatprep.subr.mxu0 0.0
  %2005 = vmatpush1.msra.mxu0 0.0
  %2006 = vmatprep.subr.mxu0 0.0
  %2007 = vmatpush1.msra.mxu0 0.0
  %2008 = vmatprep.subr.mxu0 0.0
  %2009 = vmatpush1.msra.mxu0 0.0
  %2010 = vmatprep.subr.mxu0 0.0
  %2011 = vmatpush1.msra.mxu0 0.0
  %2012 = vmatprep.subr.mxu0 0.0
  %2013 = vmatpush1.msra.mxu0 0.0
  %2014 = vmatprep.subr.mxu0 0.0
  %2015 = vmatpush1.msra.mxu0 0.0
  %2016 = vmatprep.subr.mxu0 0.0
  %2017 = vmatpush1.msra.mxu0 0.0
  %2018 = vmatprep.subr.mxu0 0.0
  %2019 = vmatpush1.msra.mxu0 0.0
  %2020 = vmatprep.subr.mxu0 0.0
  %2021 = vmatpush1.msra.mxu0 0.0
  %2022 = vmatprep.subr.mxu0 0.0
  %2023 = vmatpush1.msra.mxu0 0.0
  %2024 = vmatprep.subr.mxu0 0.0
  %2025 = vmatpush1.msra.mxu0 0.0
  %2026 = vmatprep.subr.mxu0 0.0
  %2027 = vmatpush1.msra.mxu0 0.0
  %2028 = vmatprep.subr.mxu0 0.0
  %2029 = vmatpush1.msra.mxu0 0.0
  %2030 = vmatprep.subr.mxu0 0.0
  %2031 = vmatpush1.msra.mxu0 0.0
  %2032 = vmatprep.subr.mxu0 0.0
  %2033 = vmatpush1.msra.mxu0 0.0
  %2034 = vmatprep.subr.mxu0 0.0
  %2035 = vmatpush1.msra.mxu0 0.0
  %2036 = vmatprep.subr.mxu0 0.0
  %2037 = vmatpush1.msra.mxu0 0.0
  %2038 = vmatprep.subr.mxu0 0.0
  %2039 = vmatpush1.msra.mxu0 0.0
  %2040 = vmatprep.subr.mxu0 0.0
  %2041 = vmatpush1.msra.mxu0 0.0
  %2042 = vmatprep.subr.mxu0 0.0
  %2043 = vmatpush1.msra.mxu0 0.0
  %2044 = vmatprep.subr.mxu0 0.0
  %2045 = vmatpush1.msra.mxu0 0.0
  %2046 = vmatprep.mubr.f32.mxu0 0.0
  %2047 = vmatmul.mubr.f32.gmra.mrb[0].mxu0 %v1980
  %v2048 = vpop.f32.mrb[0].mxu0
  %v2049 = vadd.f32 0.0, %v2048
  %v2050 = vpop.f32.mrb[0].mxu0
  %2051 = vdwg.mxu0
  %v2052 = vadd.f32 %v1272, %v2049
  %v2053 = vxor.u32 %v2052, 2147483648
  %v2054 = vmul.f32 %v2053, 1.442695
  %v2055 = vpow.pop %v2054
  %v2056 = vadd.f32 %v2055, 1.0
  %v2057 = vrcp.pop %v2056
  %v2058 = vmul.f32 1.0, %v2057
  %v2059 = vtanh.pop %v2052
  %v2060 = vsel %vm198, %v2058, %v2059
  %v2061 = vmul.f32 %v2060, %v1970
  %2063 = vrot.lane.b32.xlu0 %v2060, 32
  %v2064 = vpop.permute.xlu0 %2063
  %v2066 = vmul.f32 %v2060, %v2064
  %2068 = vrot.lane.b32.xlu0 %v2066, 32
  %v2069 = vpop.permute.xlu0 %2068
  %v2071 = vadd.f32 %v2061, %v2069
  %v2072 = vtanh.pop %v2071
  %2074 = vrot.lane.b32.xlu0 %v2072, 32
  %v2075 = vpop.permute.xlu0 %2074
  %v2077 = vmul.f32 %v2060, %v2075
  %v2078 = vld [vmem:[%s9] sm:$0xff]
  %v2079 = vld [vmem:[%s9 + $0x8] sm:$0xff]
  %v2080 = vld [vmem:[%s9 + $0x10] sm:$0xff]
  %v2081 = vld [vmem:[%s9 + $0x18] sm:$0xff]
  %v2082 = vld [vmem:[%s10] sm:$0x1]
  %v2084 = vlaneseq
  %v2085 = vshrl.u32 %v2084, 7
  %v2086 = vsub.s32 0, %v2085
  %v2087 = vrot.slane %v2082, %v2086
  %2090 = vrot.lane.b32.xlu0 %v2077, 64
  %v2091 = vpop.permute.xlu0 %2090
  %v2092 = vsel %vm214, %v2091, 0
  %2094 = vmatprep.subr.mxu0 0.0
  %2095 = vmatpush1.msra.mxu0 %v2078
  %2096 = vmatprep.subr.mxu0 0.0
  %2097 = vmatpush1.msra.mxu0 %v2079
  %2098 = vmatprep.subr.mxu0 0.0
  %2099 = vmatpush1.msra.mxu0 %v2080
  %2100 = vmatprep.subr.mxu0 0.0
  %2101 = vmatpush1.msra.mxu0 %v2081
  %2102 = vmatprep.subr.mxu0 0.0
  %2103 = vmatpush1.msra.mxu0 0.0
  %2104 = vmatprep.subr.mxu0 0.0
  %2105 = vmatpush1.msra.mxu0 0.0
  %2106 = vmatprep.subr.mxu0 0.0
  %2107 = vmatpush1.msra.mxu0 0.0
  %2108 = vmatprep.subr.mxu0 0.0
  %2109 = vmatpush1.msra.mxu0 0.0
  %2110 = vmatprep.subr.mxu0 0.0
  %2111 = vmatpush1.msra.mxu0 0.0
  %2112 = vmatprep.subr.mxu0 0.0
  %2113 = vmatpush1.msra.mxu0 0.0
  %2114 = vmatprep.subr.mxu0 0.0
  %2115 = vmatpush1.msra.mxu0 0.0
  %2116 = vmatprep.subr.mxu0 0.0
  %2117 = vmatpush1.msra.mxu0 0.0
  %2118 = vmatprep.subr.mxu0 0.0
  %2119 = vmatpush1.msra.mxu0 0.0
  %2120 = vmatprep.subr.mxu0 0.0
  %2121 = vmatpush1.msra.mxu0 0.0
  %2122 = vmatprep.subr.mxu0 0.0
  %2123 = vmatpush1.msra.mxu0 0.0
  %2124 = vmatprep.subr.mxu0 0.0
  %2125 = vmatpush1.msra.mxu0 0.0
  %2126 = vmatprep.subr.mxu0 0.0
  %2127 = vmatpush1.msra.mxu0 0.0
  %2128 = vmatprep.subr.mxu0 0.0
  %2129 = vmatpush1.msra.mxu0 0.0
  %2130 = vmatprep.subr.mxu0 0.0
  %2131 = vmatpush1.msra.mxu0 0.0
  %2132 = vmatprep.subr.mxu0 0.0
  %2133 = vmatpush1.msra.mxu0 0.0
  %2134 = vmatprep.subr.mxu0 0.0
  %2135 = vmatpush1.msra.mxu0 0.0
  %2136 = vmatprep.subr.mxu0 0.0
  %2137 = vmatpush1.msra.mxu0 0.0
  %2138 = vmatprep.subr.mxu0 0.0
  %2139 = vmatpush1.msra.mxu0 0.0
  %2140 = vmatprep.subr.mxu0 0.0
  %2141 = vmatpush1.msra.mxu0 0.0
  %2142 = vmatprep.subr.mxu0 0.0
  %2143 = vmatpush1.msra.mxu0 0.0
  %2144 = vmatprep.subr.mxu0 0.0
  %2145 = vmatpush1.msra.mxu0 0.0
  %2146 = vmatprep.subr.mxu0 0.0
  %2147 = vmatpush1.msra.mxu0 0.0
  %2148 = vmatprep.subr.mxu0 0.0
  %2149 = vmatpush1.msra.mxu0 0.0
  %2150 = vmatprep.subr.mxu0 0.0
  %2151 = vmatpush1.msra.mxu0 0.0
  %2152 = vmatprep.subr.mxu0 0.0
  %2153 = vmatpush1.msra.mxu0 0.0
  %2154 = vmatprep.subr.mxu0 0.0
  %2155 = vmatpush1.msra.mxu0 0.0
  %2156 = vmatprep.subr.mxu0 0.0
  %2157 = vmatpush1.msra.mxu0 0.0
  %2158 = vmatprep.mubr.f32.mxu0 0.0
  %2159 = vmatmul.mubr.f32.gmra.mrb[0].mxu0 %v1374
  %v2160 = vpop.f32.mrb[0].mxu0
  %v2161 = vadd.f32 %v2087, %v2160
  %v2162 = vpop.f32.mrb[0].mxu0
  %2163 = vmatprep.mubr.f32.mxu0 0.0
  %2164 = vmatmul.mubr.f32.gmra.mrb[0].mxu0 %v1475
  %v2165 = vpop.f32.mrb[0].mxu0
  %v2166 = vadd.f32 %v2087, %v2165
  %v2167 = vpop.f32.mrb[0].mxu0
  %2168 = vmatprep.mubr.f32.mxu0 0.0
  %2169 = vmatmul.mubr.f32.gmra.mrb[0].mxu0 %v1576
  %v2170 = vpop.f32.mrb[0].mxu0
  %v2171 = vadd.f32 %v2087, %v2170
  %v2172 = vpop.f32.mrb[0].mxu0
  %2173 = vmatprep.mubr.f32.mxu0 0.0
  %2174 = vmatmul.mubr.f32.gmra.mrb[0].mxu0 %v1677
  %v2175 = vpop.f32.mrb[0].mxu0
  %v2176 = vadd.f32 %v2087, %v2175
  %v2177 = vpop.f32.mrb[0].mxu0
  %2178 = vmatprep.mubr.f32.mxu0 0.0
  %2179 = vmatmul.mubr.f32.gmra.mrb[0].mxu0 %v1778
  %v2180 = vpop.f32.mrb[0].mxu0
  %v2181 = vadd.f32 %v2087, %v2180
  %v2182 = vpop.f32.mrb[0].mxu0
  %2183 = vmatprep.mubr.f32.mxu0 0.0
  %2184 = vmatmul.mubr.f32.gmra.mrb[0].mxu0 %v1879
  %v2185 = vpop.f32.mrb[0].mxu0
  %v2186 = vadd.f32 %v2087, %v2185
  %v2187 = vpop.f32.mrb[0].mxu0
  %2188 = vmatprep.mubr.f32.mxu0 0.0
  %2189 = vmatmul.mubr.f32.gmra.mrb[0].mxu0 %v1980
  %v2190 = vpop.f32.mrb[0].mxu0
  %v2191 = vadd.f32 %v2087, %v2190
  %v2192 = vpop.f32.mrb[0].mxu0
  %2193 = vmatprep.mubr.f32.mxu0 0.0
  %2194 = vmatmul.mubr.f32.gmra.mrb[0].mxu0 %v2092
  %v2195 = vpop.f32.mrb[0].mxu0
  %v2196 = vadd.f32 %v2087, %v2195
  %v2197 = vpop.f32.mrb[0].mxu0
  %2198 = vdwg.mxu0
  %2199 = vst [vmem:[%s11] sm:$0xff] %v2161
  %2200 = vst [vmem:[%s11 + $0x8] sm:$0xff] %v2166
  %2201 = vst [vmem:[%s11 + $0x10] sm:$0xff] %v2171
  %2202 = vst [vmem:[%s11 + $0x18] sm:$0xff] %v2176
  %2203 = vst [vmem:[%s11 + $0x20] sm:$0xff] %v2181
  %2204 = vst [vmem:[%s11 + $0x28] sm:$0xff] %v2186
  %2205 = vst [vmem:[%s11 + $0x30] sm:$0xff] %v2191
  %2206 = vst [vmem:[%s11 + $0x38] sm:$0xff] %v2196
  // Predicated region
  $region46: #{rnn_encoder_forward.1} parent=0 // pred_check
    _
  $region47: #{rnn_encoder_forward.1} parent=0 // pred_check_branch
    %2208 = sbr.rel (0) target = $region49
  $region48: #{rnn_encoder_forward.1} parent=0 // pred_region
    _
  $region49: #{rnn_encoder_forward.1} parent=0 // pred_fallthru
    _
  // Predicated region
  $region50: #{rnn_encoder_forward.1} parent=0 // pred_check
    _
  $region51: #{rnn_encoder_forward.1} parent=0 // pred_check_branch
    %2210 = sbr.rel (0) target = $region53
  $region52: #{rnn_encoder_forward.1} parent=0 // pred_region
    _
  $region53: #{rnn_encoder_forward.1} parent=0 // pred_fallthru
    _

</llo_original>
